<compile_context>
chip_gen: v7x
topology: tpu7x:2x2x1
jax: 0.10.0
libtpu: 0.0.40
codegen_flags: <defaults>
</compile_context>

<pallas_src>
import functools
import math

import jax
import jax.numpy as jnp
from jax import lax
from jax.experimental import pallas as pl
from jax.experimental.pallas import tpu as pltpu


def _round_up(x, m):
    return ((x + m - 1) // m) * m


def _ln_relu_bf16(y, gamma, beta, eps=1e-5):
    """LayerNorm (f32 statistics) + ReLU, cast to bf16 for the next matmul."""
    mu = jnp.mean(y, axis=-1, keepdims=True)
    var = jnp.mean(jnp.square(y - mu), axis=-1, keepdims=True)
    yn = (y - mu) * lax.rsqrt(var + eps) * gamma + beta
    return jnp.maximum(yn, 0.0).astype(jnp.bfloat16)


# ---------------------------------------------------------------------------
# Kernel 1: edge-tiled attention accumulation (grid axis = edge tiles).
# ---------------------------------------------------------------------------
def _edge_kernel(E, TE,
                 # scalar prefetch (SMEM)
                 src_sm, dst_sm,
                 # inputs
                 h_ref, r_ref, ef_ref,
                 w1ef, w1r, w1hi, w1hj, b1kv,
                 kg, kb, vg, vb,
                 wk2, bk2, wv2, bv2,
                 wq1, bq1, qg, qb, wq2, bq2,
                 eww, ewb, hm_oh, hm_ho,
                 # output: VMEM-resident accumulator [N_pad, 2*O]
                 acc_ref,
                 # scratch
                 hi_buf, hj_buf, contrib_buf):
    t = pl.program_id(0)
    hid = wk2.shape[0]
    O = wk2.shape[1]
    base = t * TE

    @pl.when(t == 0)
    def _init():
        acc_ref[...] = jnp.zeros_like(acc_ref)

    # ---- index-based gather of h[dst], h[src] for this edge tile -----------
    def _gather(i, carry):
        d = dst_sm[base + i]
        s = src_sm[base + i]
        hi_buf[pl.ds(i, 1), :] = h_ref[pl.ds(d, 1), :]
        hj_buf[pl.ds(i, 1), :] = h_ref[pl.ds(s, 1), :]
        return carry

    lax.fori_loop(0, TE, _gather, 0)

    hi_b = hi_buf[...].astype(jnp.bfloat16)
    hj_b = hj_buf[...].astype(jnp.bfloat16)
    r = r_ref[...]
    ef = ef_ref[...]

    # ---- fused hk/hv first Linear, concat-free (weight rows per segment) ---
    y_kv = (jnp.dot(ef.astype(jnp.bfloat16), w1ef[...],
                    preferred_element_type=jnp.float32)
            + jnp.dot(r.astype(jnp.bfloat16), w1r[...],
                      preferred_element_type=jnp.float32)
            + jnp.dot(hi_b, w1hi[...], preferred_element_type=jnp.float32)
            + jnp.dot(hj_b, w1hj[...], preferred_element_type=jnp.float32)
            + b1kv[...])
    yk = y_kv[:, :hid]
    yv = y_kv[:, hid:]

    k = jnp.dot(_ln_relu_bf16(yk, kg[...], kb[...]), wk2[...],
                preferred_element_type=jnp.float32) + bk2[...]
    v = jnp.dot(_ln_relu_bf16(yv, vg[...], vb[...]), wv2[...],
                preferred_element_type=jnp.float32) + bv2[...]

    # ---- ew_net ('r'): VPU multiply + lane reduction (no 1-wide matmul) ----
    e_w = jax.nn.sigmoid(jnp.sum(r * eww[...], axis=-1, keepdims=True)
                         + ewb[...])
    v = v * e_w

    # ---- q = hq(h)[dst] == hq(h[dst]); 1/sqrt(head_dim) folded into wq2 ----
    yq = jnp.dot(hi_b, wq1[...], preferred_element_type=jnp.float32) + bq1[...]
    q = jnp.dot(_ln_relu_bf16(yq, qg[...], qb[...]), wq2[...],
                preferred_element_type=jnp.float32) + bq2[...]

    # ---- per-head logits and unnormalized softmax weights ------------------
    logits = jnp.dot(q * k, hm_oh[...],
                     preferred_element_type=jnp.float32)              # [TE, H]
    # TODO(synk): single streaming pass -> no per-destination max subtraction
    # (exact for moderate logits; a flash-style running per-dst max would be
    # needed if |logits| can approach ~88).
    eidx = base + lax.broadcasted_iota(jnp.int32, (TE, 1), 0)
    valid = (eidx < E).astype(jnp.float32)                            # [TE, 1]
    p = jnp.exp(logits) * valid                                       # [TE, H]
    p_full = jnp.dot(p, hm_ho[...],
                     preferred_element_type=jnp.float32)              # [TE, O]

    contrib_buf[:, :O] = p_full * v      # softmax numerator rows
    contrib_buf[:, O:] = p_full          # denominator (replicated per head)

    # ---- index-based scatter-add into the resident accumulator -------------
    def _scatter(i, carry):
        d = dst_sm[base + i]
        acc_ref[pl.ds(d, 1), :] = (acc_ref[pl.ds(d, 1), :]
                                   + contrib_buf[pl.ds(i, 1), :])
        return carry

    lax.fori_loop(0, TE, _scatter, 0)


# ---------------------------------------------------------------------------
# Kernel 2: node-tiled finalize (division, node_output MLP, residual).
# ---------------------------------------------------------------------------
def _node_kernel(acc_ref, h_ref,
                 w1a, w1h, b1, g, be, w2, b2,
                 out_ref):
    O = w1a.shape[0]
    acc = acc_ref[...]
    num = acc[:, :O]
    den = acc[:, O:]
    agg = num / jnp.maximum(den, 1e-30)      # nodes without incoming edges -> 0
    h = h_ref[...]

    # node_output MLP with concat-free first Linear (rows split: [agg | h])
    y = (jnp.dot(agg.astype(jnp.bfloat16), w1a[...],
                 preferred_element_type=jnp.float32)
         + jnp.dot(h.astype(jnp.bfloat16), w1h[...],
                   preferred_element_type=jnp.float32)
         + b1[...])
    out = jnp.dot(_ln_relu_bf16(y, g[...], be[...]), w2[...],
                  preferred_element_type=jnp.float32) + b2[...]
    out_ref[...] = (out + h).astype(out_ref.dtype)


def _const_spec(shape):
    zeros = (0,) * len(shape)

    def idx(*_args):
        return zeros

    return pl.BlockSpec(shape, idx)


# ---------------------------------------------------------------------------
# Wrapper.
# ---------------------------------------------------------------------------
def base_x2h_att_layer(h, r_feat, edge_feat, edge_index, params, n_heads,
                       *, edge_tile=512, node_tile=256,
                       vmem_limit_bytes=48 * 1024 * 1024):
    """BaseX2HAttLayer.forward (ew_net_type='r', out_fc=True, norm=True,
    act='relu') as two Pallas TPU calls."""
    h = h.astype(jnp.float32)
    r_feat = r_feat.astype(jnp.float32)
    edge_feat = edge_feat.astype(jnp.float32)

    N, D = h.shape
    E = edge_index.shape[1]
    R = r_feat.shape[1]
    Fe = edge_feat.shape[1]

    hk_w1, hk_b1, hk_g, hk_be, hk_w2, hk_b2 = params["hk"]
    hv_w1, hv_b1, hv_g, hv_be, hv_w2, hv_b2 = params["hv"]
    hq_w1, hq_b1, hq_g, hq_be, hq_w2, hq_b2 = params["hq"]
    ew_w, ew_b = params["ew"]
    no_w1, no_b1, no_g, no_be, no_w2, no_b2 = params["no"]

    hid = hk_w1.shape[1]
    O = hk_w2.shape[1]
    assert O % n_heads == 0
    hd = O // n_heads
    assert D == O == hid, "residual/out_fc require input==hidden==output dim"
    assert hk_w1.shape[0] == Fe + R + 2 * D

    bf16 = jnp.bfloat16
    f32 = jnp.float32

    # ---- tiling / padding (pad N and E; padded edges masked in-kernel) -----
    TE = min(edge_tile, _round_up(E, 8))
    E_pad = _round_up(E, TE)
    TN = min(node_tile, _round_up(N, 8))
    N_pad = _round_up(N, TN)

    h_pad = jnp.pad(h, ((0, N_pad - N), (0, 0)))
    r_pad = jnp.pad(r_feat, ((0, E_pad - E), (0, 0)))
    ef_pad = jnp.pad(edge_feat, ((0, E_pad - E), (0, 0)))
    src = jnp.pad(edge_index[0].astype(jnp.int32), (0, E_pad - E))
    dst = jnp.pad(edge_index[1].astype(jnp.int32), (0, E_pad - E))

    # ---- weight packing: fuse hk/hv first Linears, split rows per segment --
    def seg(w):  # rows of kv_input = [edge_feat | r_feat | hi | hj]
        return w[:Fe], w[Fe:Fe + R], w[Fe + R:Fe + R + D], w[Fe + R + D:]

    kef, kr, khi, khj = seg(hk_w1)
    vef, vr, vhi, vhj = seg(hv_w1)
    w1ef = jnp.concatenate([kef, vef], axis=1).astype(bf16)
    w1r = jnp.concatenate([kr, vr], axis=1).astype(bf16)
    w1hi = jnp.concatenate([khi, vhi], axis=1).astype(bf16)
    w1hj = jnp.concatenate([khj, vhj], axis=1).astype(bf16)
    b1kv = jnp.concatenate([hk_b1, hv_b1], axis=1).astype(f32)

    scale = 1.0 / math.sqrt(hd)          # attention scale folded into hq_w2/b2
    wq2s = (hq_w2 * scale).astype(bf16)
    bq2s = (hq_b2 * scale).astype(f32)

    # per-head block masks (reduce over head_dim / broadcast per head)
    head_of_col = jnp.arange(O) // hd
    hm_oh = (head_of_col[:, None] == jnp.arange(n_heads)[None, :]).astype(f32)
    hm_ho = jnp.transpose(hm_oh)

    edge_args = [
        w1ef, w1r, w1hi, w1hj, b1kv,
        hk_g.astype(f32), hk_be.astype(f32), hv_g.astype(f32), hv_be.astype(f32),
        hk_w2.astype(bf16), hk_b2.astype(f32),
        hv_w2.astype(bf16), hv_b2.astype(f32),
        hq_w1.astype(bf16), hq_b1.astype(f32),
        hq_g.astype(f32), hq_be.astype(f32),
        wq2s, bq2s,
        jnp.reshape(ew_w, (1, R)).astype(f32), jnp.reshape(ew_b, (1, 1)).astype(f32),
        hm_oh, hm_ho,
    ]

    n_edge_tiles = E_pad // TE
    edge_in_specs = (
        [pl.BlockSpec((N_pad, D), lambda t, s, d: (0, 0)),     # h (resident)
         pl.BlockSpec((TE, R), lambda t, s, d: (t, 0)),        # r_feat tile
         pl.BlockSpec((TE, Fe), lambda t, s, d: (t, 0))]       # edge_feat tile
        + [_const_spec(a.shape) for a in edge_args])

    acc = pl.pallas_call(
        functools.partial(_edge_kernel, E, TE),
        out_shape=jax.ShapeDtypeStruct((N_pad, 2 * O), jnp.float32),
        grid_spec=pltpu.PrefetchScalarGridSpec(
            num_scalar_prefetch=2,
            grid=(n_edge_tiles,),
            in_specs=edge_in_specs,
            out_specs=pl.BlockSpec((N_pad, 2 * O), lambda t, s, d: (0, 0)),
            scratch_shapes=[pltpu.VMEM((TE, D), jnp.float32),
                            pltpu.VMEM((TE, D), jnp.float32),
                            pltpu.VMEM((TE, 2 * O), jnp.float32)]),
        compiler_params=pltpu.CompilerParams(
            dimension_semantics=("arbitrary",),
            vmem_limit_bytes=vmem_limit_bytes),
    )(src, dst, h_pad, r_pad, ef_pad, *edge_args)

    node_args = [
        no_w1[:O].astype(bf16), no_w1[O:].astype(bf16), no_b1.astype(f32),
        no_g.astype(f32), no_be.astype(f32),
        no_w2.astype(bf16), no_b2.astype(f32),
    ]
    out = pl.pallas_call(
        _node_kernel,
        out_shape=jax.ShapeDtypeStruct((N_pad, D), jnp.float32),
        grid=(N_pad // TN,),
        in_specs=([pl.BlockSpec((TN, 2 * O), lambda i: (i, 0)),
                   pl.BlockSpec((TN, D), lambda i: (i, 0))]
                  + [_const_spec(a.shape) for a in node_args]),
        out_specs=pl.BlockSpec((TN, D), lambda i: (i, 0)),
        compiler_params=pltpu.CompilerParams(
            dimension_semantics=("parallel",),
            vmem_limit_bytes=vmem_limit_bytes),
    )(acc, h_pad, *node_args)

    return out[:N]


# ---------------------------------------------------------------------------
# Pure-JAX (f32) reference for correctness checking.
# ---------------------------------------------------------------------------
def _ref_mlp(x, w1, b1, g, b, w2, b2, eps=1e-5):
    y = x @ w1 + b1
    mu = y.mean(-1, keepdims=True)
    var = ((y - mu) ** 2).mean(-1, keepdims=True)
    y = (y - mu) / jnp.sqrt(var + eps) * g + b
    return jnp.maximum(y, 0.0) @ w2 + b2


def reference_forward(h, r_feat, edge_feat, edge_index, params, n_heads):
    N = h.shape[0]
    src, dst = edge_index[0], edge_index[1]
    hi, hj = h[dst], h[src]
    kv = jnp.concatenate([edge_feat, r_feat, hi, hj], axis=-1)
    k = _ref_mlp(kv, *params["hk"])
    v = _ref_mlp(kv, *params["hv"])
    q = _ref_mlp(h, *params["hq"])
    e_w = jax.nn.sigmoid(r_feat @ params["ew"][0] + params["ew"][1])
    v = v * e_w
    O = k.shape[-1]
    H = n_heads
    hd = O // H
    kh = k.reshape(-1, H, hd)
    vh = v.reshape(-1, H, hd)
    qh = q.reshape(-1, H, hd)
    logits = (qh[dst] * kh).sum(-1) / math.sqrt(hd)                    # [E, H]
    gmax = jax.ops.segment_max(logits, dst, num_segments=N)            # [N, H]
    p = jnp.exp(logits - gmax[dst])
    denom = jax.ops.segment_sum(p, dst, num_segments=N)
    alpha = p / denom[dst]
    m = (alpha[..., None] * vh).reshape(-1, O)
    out = jax.ops.segment_sum(m, dst, num_segments=N)                  # [N, O]
    out = _ref_mlp(jnp.concatenate([out, h], axis=-1), *params["no"])
    return out + h


def _init_mlp(key, in_dim, hidden_dim, out_dim):
    k1, k2 = jax.random.split(key)
    w1 = jax.random.normal(k1, (in_dim, hidden_dim), jnp.float32) / math.sqrt(in_dim)
    b1 = jnp.zeros((1, hidden_dim), jnp.float32)
    gamma = jnp.ones((1, hidden_dim), jnp.float32)
    beta = jnp.zeros((1, hidden_dim), jnp.float32)
    w2 = jax.random.normal(k2, (hidden_dim, out_dim), jnp.float32) / math.sqrt(hidden_dim)
    b2 = jnp.zeros((1, out_dim), jnp.float32)
    return (w1, b1, gamma, beta, w2, b2)


if __name__ == "__main__":
    # Small but realistic BaseX2HAttLayer config: 128-wide features so MXU
    # tiles and output stores are lane-dense; small tiles exercise multi-tile
    # accumulation, edge masking and node padding.
    input_dim = hidden_dim = output_dim = 128
    n_heads = 16
    edge_feat_dim = 4
    r_feat_dim = 16
    N, E = 20, 50
    kv_input_dim = 2 * input_dim + edge_feat_dim + r_feat_dim

    key = jax.random.PRNGKey(0)
    keys = jax.random.split(key, 10)

    h = jax.random.normal(keys[0], (N, input_dim), jnp.float32)
    r_feat = jax.random.normal(keys[1], (E, r_feat_dim), jnp.float32)
    edge_feat = jax.random.normal(keys[2], (E, edge_feat_dim), jnp.float32)
    src = jax.random.randint(keys[3], (E,), 0, N, jnp.int32)
    dst = jax.random.randint(keys[4], (E,), 0, N, jnp.int32)
    edge_index = jnp.stack([src, dst])

    params = {
        "hk": _init_mlp(keys[5], kv_input_dim, hidden_dim, output_dim),
        "hv": _init_mlp(keys[6], kv_input_dim, hidden_dim, output_dim),
        "hq": _init_mlp(keys[7], input_dim, hidden_dim, output_dim),
        "ew": (jax.random.normal(keys[8], (r_feat_dim, 1), jnp.float32) * 0.3,
               jnp.zeros((1, 1), jnp.float32)),
        "no": _init_mlp(keys[9], 2 * hidden_dim, hidden_dim, hidden_dim),
    }

    out = base_x2h_att_layer(h, r_feat, edge_feat, edge_index, params, n_heads,
                             edge_tile=16, node_tile=8)
    out = jax.block_until_ready(out)
    assert out.shape == (N, input_dim)
    assert bool(jnp.all(jnp.isfinite(out)))

    ref = reference_forward(h, r_feat, edge_feat, edge_index, params, n_heads)
    rel_err = float(jnp.linalg.norm(out - ref) / (jnp.linalg.norm(ref) + 1e-12))
    assert rel_err < 0.1, f"relative L2 error too large: {rel_err}"
    print("KERNEL_OK")
</pallas_src>

<mosaic_0001>
module attributes {stable_mosaic.version = 11 : i64} {
  func.func @_edge_kernel(%arg0: i32, %arg1: memref<64xi32, #tpu.memory_space<smem>>, %arg2: memref<64xi32, #tpu.memory_space<smem>>, %arg3: memref<24x128xf32, #tpu.memory_space<vmem>>, %arg4: memref<16x16xf32, #tpu.memory_space<vmem>>, %arg5: memref<16x4xf32, #tpu.memory_space<vmem>>, %arg6: memref<4x256xbf16, #tpu.memory_space<vmem>>, %arg7: memref<16x256xbf16, #tpu.memory_space<vmem>>, %arg8: memref<128x256xbf16, #tpu.memory_space<vmem>>, %arg9: memref<128x256xbf16, #tpu.memory_space<vmem>>, %arg10: memref<1x256xf32, #tpu.memory_space<vmem>>, %arg11: memref<1x128xf32, #tpu.memory_space<vmem>>, %arg12: memref<1x128xf32, #tpu.memory_space<vmem>>, %arg13: memref<1x128xf32, #tpu.memory_space<vmem>>, %arg14: memref<1x128xf32, #tpu.memory_space<vmem>>, %arg15: memref<128x128xbf16, #tpu.memory_space<vmem>>, %arg16: memref<1x128xf32, #tpu.memory_space<vmem>>, %arg17: memref<128x128xbf16, #tpu.memory_space<vmem>>, %arg18: memref<1x128xf32, #tpu.memory_space<vmem>>, %arg19: memref<128x128xbf16, #tpu.memory_space<vmem>>, %arg20: memref<1x128xf32, #tpu.memory_space<vmem>>, %arg21: memref<1x128xf32, #tpu.memory_space<vmem>>, %arg22: memref<1x128xf32, #tpu.memory_space<vmem>>, %arg23: memref<128x128xbf16, #tpu.memory_space<vmem>>, %arg24: memref<1x128xf32, #tpu.memory_space<vmem>>, %arg25: memref<1x16xf32, #tpu.memory_space<vmem>>, %arg26: memref<1x1xf32, #tpu.memory_space<vmem>>, %arg27: memref<128x16xf32, #tpu.memory_space<vmem>>, %arg28: memref<16x128xf32, #tpu.memory_space<vmem>>, %arg29: memref<24x256xf32, #tpu.memory_space<vmem>>, %arg30: memref<16x128xf32, #tpu.memory_space<vmem>>, %arg31: memref<16x128xf32, #tpu.memory_space<vmem>>, %arg32: memref<16x256xf32, #tpu.memory_space<vmem>>) attributes {dimension_semantics = [#tpu.dimension_semantics<arbitrary>], iteration_bounds = array<i64: 4>, scalar_prefetch = 2 : i64, scratch_operands = 3 : i64, tpu.core_type = #tpu.core_type<tc>, window_params = [{pipeline_mode = #tpu.pipeline_mode<synchronous>, transform_indices = @transform_0, window_bounds = array<i64: 24, 128>}, {transform_indices = @transform_1, window_bounds = array<i64: 16, 16>}, {transform_indices = @transform_2, window_bounds = array<i64: 16, 4>}, {pipeline_mode = #tpu.pipeline_mode<synchronous>, transform_indices = @transform_3, window_bounds = array<i64: 4, 256>}, {pipeline_mode = #tpu.pipeline_mode<synchronous>, transform_indices = @transform_4, window_bounds = array<i64: 16, 256>}, {pipeline_mode = #tpu.pipeline_mode<synchronous>, transform_indices = @transform_5, window_bounds = array<i64: 128, 256>}, {pipeline_mode = #tpu.pipeline_mode<synchronous>, transform_indices = @transform_6, window_bounds = array<i64: 128, 256>}, {pipeline_mode = #tpu.pipeline_mode<synchronous>, transform_indices = @transform_7, window_bounds = array<i64: 1, 256>}, {pipeline_mode = #tpu.pipeline_mode<synchronous>, transform_indices = @transform_8, window_bounds = array<i64: 1, 128>}, {pipeline_mode = #tpu.pipeline_mode<synchronous>, transform_indices = @transform_9, window_bounds = array<i64: 1, 128>}, {pipeline_mode = #tpu.pipeline_mode<synchronous>, transform_indices = @transform_10, window_bounds = array<i64: 1, 128>}, {pipeline_mode = #tpu.pipeline_mode<synchronous>, transform_indices = @transform_11, window_bounds = array<i64: 1, 128>}, {pipeline_mode = #tpu.pipeline_mode<synchronous>, transform_indices = @transform_12, window_bounds = array<i64: 128, 128>}, {pipeline_mode = #tpu.pipeline_mode<synchronous>, transform_indices = @transform_13, window_bounds = array<i64: 1, 128>}, {pipeline_mode = #tpu.pipeline_mode<synchronous>, transform_indices = @transform_14, window_bounds = array<i64: 128, 128>}, {pipeline_mode = #tpu.pipeline_mode<synchronous>, transform_indices = @transform_15, window_bounds = array<i64: 1, 128>}, {pipeline_mode = #tpu.pipeline_mode<synchronous>, transform_indices = @transform_16, window_bounds = array<i64: 128, 128>}, {pipeline_mode = #tpu.pipeline_mode<synchronous>, transform_indices = @transform_17, window_bounds = array<i64: 1, 128>}, {pipeline_mode = #tpu.pipeline_mode<synchronous>, transform_indices = @transform_18, window_bounds = array<i64: 1, 128>}, {pipeline_mode = #tpu.pipeline_mode<synchronous>, transform_indices = @transform_19, window_bounds = array<i64: 1, 128>}, {pipeline_mode = #tpu.pipeline_mode<synchronous>, transform_indices = @transform_20, window_bounds = array<i64: 128, 128>}, {pipeline_mode = #tpu.pipeline_mode<synchronous>, transform_indices = @transform_21, window_bounds = array<i64: 1, 128>}, {pipeline_mode = #tpu.pipeline_mode<synchronous>, transform_indices = @transform_22, window_bounds = array<i64: 1, 16>}, {pipeline_mode = #tpu.pipeline_mode<synchronous>, transform_indices = @transform_23, window_bounds = array<i64: 1, 1>}, {pipeline_mode = #tpu.pipeline_mode<synchronous>, transform_indices = @transform_24, window_bounds = array<i64: 128, 16>}, {pipeline_mode = #tpu.pipeline_mode<synchronous>, transform_indices = @transform_25, window_bounds = array<i64: 16, 128>}, {pipeline_mode = #tpu.pipeline_mode<synchronous>, transform_indices = @transform_26, window_bounds = array<i64: 24, 256>}]} {
    %c16_i32 = arith.constant 16 : i32
    %0 = arith.muli %arg0, %c16_i32 : i32
    %c0_i32 = arith.constant 0 : i32
    %1 = arith.cmpi eq, %arg0, %c0_i32 : i32
    %2 = arith.extui %1 : i1 to i32
    %c0_i32_0 = arith.constant 0 : i32
    %3 = arith.cmpi ne, %2, %c0_i32_0 : i32
    scf.if %3 {
      %cst_93 = arith.constant 0.000000e+00 : f32
      %164 = vector.broadcast %cst_93 : f32 to vector<24x256xf32>
      %c0_94 = arith.constant 0 : index
      %c0_95 = arith.constant 0 : index
      %165 = vector.load %arg29[%c0_94, %c0_95] : memref<24x256xf32, #tpu.memory_space<vmem>>, vector<24x256xf32>
      tpu.vector_store %arg29[%c0_94, %c0_95], %164 {strides = array<i32>} : memref<24x256xf32, #tpu.memory_space<vmem>>, vector<24x256xf32>,
    } else {
    }
    %c0_i32_1 = arith.constant 0 : i32
    %c16_i32_2 = arith.constant 16 : i32
    %4 = arith.addi %c0_i32_1, %c16_i32_2 : i32
    %c1_i32 = arith.constant 1 : i32
    scf.for %arg33 = %c0_i32_1 to %4 step %c1_i32  : i32 {
      %164 = arith.addi %0, %arg33 : i32
      %165 = arith.index_cast %164 : i32 to index
      %166 = memref.load %arg2[%165] : memref<64xi32, #tpu.memory_space<smem>>
      %167 = arith.addi %0, %arg33 : i32
      %168 = arith.index_cast %167 : i32 to index
      %169 = memref.load %arg1[%168] : memref<64xi32, #tpu.memory_space<smem>>
      %170 = arith.index_cast %166 : i32 to index
      %c0_93 = arith.constant 0 : index
      %171 = vector.load %arg3[%170, %c0_93] : memref<24x128xf32, #tpu.memory_space<vmem>>, vector<1x128xf32>
      %172 = arith.index_cast %arg33 : i32 to index
      %c0_94 = arith.constant 0 : index
      %173 = vector.load %arg30[%172, %c0_94] : memref<16x128xf32, #tpu.memory_space<vmem>>, vector<1x128xf32>
      tpu.vector_store %arg30[%172, %c0_94], %171 {strides = array<i32>} : memref<16x128xf32, #tpu.memory_space<vmem>>, vector<1x128xf32>,
      %174 = arith.index_cast %169 : i32 to index
      %c0_95 = arith.constant 0 : index
      %175 = vector.load %arg3[%174, %c0_95] : memref<24x128xf32, #tpu.memory_space<vmem>>, vector<1x128xf32>
      %176 = arith.index_cast %arg33 : i32 to index
      %c0_96 = arith.constant 0 : index
      %177 = vector.load %arg31[%176, %c0_96] : memref<16x128xf32, #tpu.memory_space<vmem>>, vector<1x128xf32>
      tpu.vector_store %arg31[%176, %c0_96], %175 {strides = array<i32>} : memref<16x128xf32, #tpu.memory_space<vmem>>, vector<1x128xf32>,
    }
    %c16_i32_3 = arith.constant 16 : i32
    %c0 = arith.constant 0 : index
    %c0_4 = arith.constant 0 : index
    %5 = vector.load %arg30[%c0, %c0_4] : memref<16x128xf32, #tpu.memory_space<vmem>>, vector<16x128xf32>
    %6 = arith.truncf %5 : vector<16x128xf32> to vector<16x128xbf16>
    %c0_5 = arith.constant 0 : index
    %c0_6 = arith.constant 0 : index
    %7 = vector.load %arg31[%c0_5, %c0_6] : memref<16x128xf32, #tpu.memory_space<vmem>>, vector<16x128xf32>
    %8 = arith.truncf %7 : vector<16x128xf32> to vector<16x128xbf16>
    %c0_7 = arith.constant 0 : index
    %c0_8 = arith.constant 0 : index
    %9 = vector.load %arg4[%c0_7, %c0_8] : memref<16x16xf32, #tpu.memory_space<vmem>>, vector<16x16xf32>
    %c0_9 = arith.constant 0 : index
    %c0_10 = arith.constant 0 : index
    %10 = vector.load %arg5[%c0_9, %c0_10] : memref<16x4xf32, #tpu.memory_space<vmem>>, vector<16x4xf32>
    %11 = arith.truncf %10 : vector<16x4xf32> to vector<16x4xbf16>
    %c0_11 = arith.constant 0 : index
    %c0_12 = arith.constant 0 : index
    %12 = vector.load %arg6[%c0_11, %c0_12] : memref<4x256xbf16, #tpu.memory_space<vmem>>, vector<4x256xbf16>
    %cst = arith.constant dense<0.000000e+00> : vector<16x256xf32>
    %13 = tpu.matmul %11, %12, %cst {dimension_numbers = #tpu.dot_dimension_numbers<[1], [0], [0], [1], [0, 0, 1, 1], [], []>} : vector<16x4xbf16>, vector<4x256xbf16>, vector<16x256xf32> -> vector<16x256xf32>
    %14 = arith.truncf %9 : vector<16x16xf32> to vector<16x16xbf16>
    %c0_13 = arith.constant 0 : index
    %c0_14 = arith.constant 0 : index
    %15 = vector.load %arg7[%c0_13, %c0_14] : memref<16x256xbf16, #tpu.memory_space<vmem>>, vector<16x256xbf16>
    %cst_15 = arith.constant dense<0.000000e+00> : vector<16x256xf32>
    %16 = tpu.matmul %14, %15, %cst_15 {dimension_numbers = #tpu.dot_dimension_numbers<[1], [0], [0], [1], [0, 0, 1, 1], [], []>} : vector<16x16xbf16>, vector<16x256xbf16>, vector<16x256xf32> -> vector<16x256xf32>
    %17 = arith.addf %13, %16 : vector<16x256xf32>
    %c0_16 = arith.constant 0 : index
    %c0_17 = arith.constant 0 : index
    %18 = vector.load %arg8[%c0_16, %c0_17] : memref<128x256xbf16, #tpu.memory_space<vmem>>, vector<128x256xbf16>
    %cst_18 = arith.constant dense<0.000000e+00> : vector<16x256xf32>
    %19 = tpu.matmul %6, %18, %cst_18 {dimension_numbers = #tpu.dot_dimension_numbers<[1], [0], [0], [1], [0, 0, 1, 1], [], []>} : vector<16x128xbf16>, vector<128x256xbf16>, vector<16x256xf32> -> vector<16x256xf32>
    %20 = arith.addf %17, %19 : vector<16x256xf32>
    %c0_19 = arith.constant 0 : index
    %c0_20 = arith.constant 0 : index
    %21 = vector.load %arg9[%c0_19, %c0_20] : memref<128x256xbf16, #tpu.memory_space<vmem>>, vector<128x256xbf16>
    %cst_21 = arith.constant dense<0.000000e+00> : vector<16x256xf32>
    %22 = tpu.matmul %8, %21, %cst_21 {dimension_numbers = #tpu.dot_dimension_numbers<[1], [0], [0], [1], [0, 0, 1, 1], [], []>} : vector<16x128xbf16>, vector<128x256xbf16>, vector<16x256xf32> -> vector<16x256xf32>
    %23 = arith.addf %20, %22 : vector<16x256xf32>
    %c0_22 = arith.constant 0 : index
    %c0_23 = arith.constant 0 : index
    %24 = vector.load %arg10[%c0_22, %c0_23] : memref<1x256xf32, #tpu.memory_space<vmem>>, vector<1x256xf32>
    %25 = vector.broadcast %24 : vector<1x256xf32> to vector<16x256xf32>
    %26 = arith.addf %23, %25 : vector<16x256xf32>
    %27 = vector.extract_strided_slice %26 {offsets = [0, 0], sizes = [16, 128], strides = [1, 1]} : vector<16x256xf32> to vector<16x128xf32>
    %28 = vector.extract_strided_slice %26 {offsets = [0, 128], sizes = [16, 128], strides = [1, 1]} : vector<16x256xf32> to vector<16x128xf32>
    %c0_24 = arith.constant 0 : index
    %c0_25 = arith.constant 0 : index
    %29 = vector.load %arg11[%c0_24, %c0_25] : memref<1x128xf32, #tpu.memory_space<vmem>>, vector<1x128xf32>
    %c0_26 = arith.constant 0 : index
    %c0_27 = arith.constant 0 : index
    %30 = vector.load %arg12[%c0_26, %c0_27] : memref<1x128xf32, #tpu.memory_space<vmem>>, vector<1x128xf32>
    %cst_28 = arith.constant dense<0.000000e+00> : vector<16xf32>
    %31 = vector.multi_reduction <add>, %27, %cst_28 [1] : vector<16x128xf32> to vector<16xf32>
    %32 = vector.shape_cast %31 : vector<16xf32> to vector<16x1xf32>
    %cst_29 = arith.constant 1.280000e+02 : f32
    %33 = vector.broadcast %cst_29 : f32 to vector<16x1xf32>
    %34 = arith.divf %32, %33 : vector<16x1xf32>
    %35 = vector.broadcast %34 : vector<16x1xf32> to vector<16x128xf32>
    %36 = arith.subf %27, %35 : vector<16x128xf32>
    %37 = arith.mulf %36, %36 : vector<16x128xf32>
    %cst_30 = arith.constant dense<0.000000e+00> : vector<16xf32>
    %38 = vector.multi_reduction <add>, %37, %cst_30 [1] : vector<16x128xf32> to vector<16xf32>
    %39 = vector.shape_cast %38 : vector<16xf32> to vector<16x1xf32>
    %cst_31 = arith.constant 1.280000e+02 : f32
    %40 = vector.broadcast %cst_31 : f32 to vector<16x1xf32>
    %41 = arith.divf %39, %40 : vector<16x1xf32>
    %42 = vector.broadcast %34 : vector<16x1xf32> to vector<16x128xf32>
    %43 = arith.subf %27, %42 : vector<16x128xf32>
    %cst_32 = arith.constant 9.99999974E-6 : f32
    %44 = vector.broadcast %cst_32 : f32 to vector<16x1xf32>
    %45 = arith.addf %41, %44 : vector<16x1xf32>
    %46 = math.rsqrt %45 : vector<16x1xf32>
    %47 = vector.broadcast %46 : vector<16x1xf32> to vector<16x128xf32>
    %48 = arith.mulf %43, %47 : vector<16x128xf32>
    %49 = vector.broadcast %29 : vector<1x128xf32> to vector<16x128xf32>
    %50 = arith.mulf %48, %49 : vector<16x128xf32>
    %51 = vector.broadcast %30 : vector<1x128xf32> to vector<16x128xf32>
    %52 = arith.addf %50, %51 : vector<16x128xf32>
    %cst_33 = arith.constant 0.000000e+00 : f32
    %53 = vector.broadcast %cst_33 : f32 to vector<16x128xf32>
    %54 = arith.maximumf %52, %53 : vector<16x128xf32>
    %55 = arith.truncf %54 : vector<16x128xf32> to vector<16x128xbf16>
    %c0_34 = arith.constant 0 : index
    %c0_35 = arith.constant 0 : index
    %56 = vector.load %arg15[%c0_34, %c0_35] : memref<128x128xbf16, #tpu.memory_space<vmem>>, vector<128x128xbf16>
    %cst_36 = arith.constant dense<0.000000e+00> : vector<16x128xf32>
    %57 = tpu.matmul %55, %56, %cst_36 {dimension_numbers = #tpu.dot_dimension_numbers<[1], [0], [0], [1], [0, 0, 1, 1], [], []>} : vector<16x128xbf16>, vector<128x128xbf16>, vector<16x128xf32> -> vector<16x128xf32>
    %c0_37 = arith.constant 0 : index
    %c0_38 = arith.constant 0 : index
    %58 = vector.load %arg16[%c0_37, %c0_38] : memref<1x128xf32, #tpu.memory_space<vmem>>, vector<1x128xf32>
    %59 = vector.broadcast %58 : vector<1x128xf32> to vector<16x128xf32>
    %60 = arith.addf %57, %59 : vector<16x128xf32>
    %c0_39 = arith.constant 0 : index
    %c0_40 = arith.constant 0 : index
    %61 = vector.load %arg13[%c0_39, %c0_40] : memref<1x128xf32, #tpu.memory_space<vmem>>, vector<1x128xf32>
    %c0_41 = arith.constant 0 : index
    %c0_42 = arith.constant 0 : index
    %62 = vector.load %arg14[%c0_41, %c0_42] : memref<1x128xf32, #tpu.memory_space<vmem>>, vector<1x128xf32>
    %cst_43 = arith.constant dense<0.000000e+00> : vector<16xf32>
    %63 = vector.multi_reduction <add>, %28, %cst_43 [1] : vector<16x128xf32> to vector<16xf32>
    %64 = vector.shape_cast %63 : vector<16xf32> to vector<16x1xf32>
    %cst_44 = arith.constant 1.280000e+02 : f32
    %65 = vector.broadcast %cst_44 : f32 to vector<16x1xf32>
    %66 = arith.divf %64, %65 : vector<16x1xf32>
    %67 = vector.broadcast %66 : vector<16x1xf32> to vector<16x128xf32>
    %68 = arith.subf %28, %67 : vector<16x128xf32>
    %69 = arith.mulf %68, %68 : vector<16x128xf32>
    %cst_45 = arith.constant dense<0.000000e+00> : vector<16xf32>
    %70 = vector.multi_reduction <add>, %69, %cst_45 [1] : vector<16x128xf32> to vector<16xf32>
    %71 = vector.shape_cast %70 : vector<16xf32> to vector<16x1xf32>
    %cst_46 = arith.constant 1.280000e+02 : f32
    %72 = vector.broadcast %cst_46 : f32 to vector<16x1xf32>
    %73 = arith.divf %71, %72 : vector<16x1xf32>
    %74 = vector.broadcast %66 : vector<16x1xf32> to vector<16x128xf32>
    %75 = arith.subf %28, %74 : vector<16x128xf32>
    %cst_47 = arith.constant 9.99999974E-6 : f32
    %76 = vector.broadcast %cst_47 : f32 to vector<16x1xf32>
    %77 = arith.addf %73, %76 : vector<16x1xf32>
    %78 = math.rsqrt %77 : vector<16x1xf32>
    %79 = vector.broadcast %78 : vector<16x1xf32> to vector<16x128xf32>
    %80 = arith.mulf %75, %79 : vector<16x128xf32>
    %81 = vector.broadcast %61 : vector<1x128xf32> to vector<16x128xf32>
    %82 = arith.mulf %80, %81 : vector<16x128xf32>
    %83 = vector.broadcast %62 : vector<1x128xf32> to vector<16x128xf32>
    %84 = arith.addf %82, %83 : vector<16x128xf32>
    %cst_48 = arith.constant 0.000000e+00 : f32
    %85 = vector.broadcast %cst_48 : f32 to vector<16x128xf32>
    %86 = arith.maximumf %84, %85 : vector<16x128xf32>
    %87 = arith.truncf %86 : vector<16x128xf32> to vector<16x128xbf16>
    %c0_49 = arith.constant 0 : index
    %c0_50 = arith.constant 0 : index
    %88 = vector.load %arg17[%c0_49, %c0_50] : memref<128x128xbf16, #tpu.memory_space<vmem>>, vector<128x128xbf16>
    %cst_51 = arith.constant dense<0.000000e+00> : vector<16x128xf32>
    %89 = tpu.matmul %87, %88, %cst_51 {dimension_numbers = #tpu.dot_dimension_numbers<[1], [0], [0], [1], [0, 0, 1, 1], [], []>} : vector<16x128xbf16>, vector<128x128xbf16>, vector<16x128xf32> -> vector<16x128xf32>
    %c0_52 = arith.constant 0 : index
    %c0_53 = arith.constant 0 : index
    %90 = vector.load %arg18[%c0_52, %c0_53] : memref<1x128xf32, #tpu.memory_space<vmem>>, vector<1x128xf32>
    %91 = vector.broadcast %90 : vector<1x128xf32> to vector<16x128xf32>
    %92 = arith.addf %89, %91 : vector<16x128xf32>
    %c0_54 = arith.constant 0 : index
    %c0_55 = arith.constant 0 : index
    %93 = vector.load %arg25[%c0_54, %c0_55] : memref<1x16xf32, #tpu.memory_space<vmem>>, vector<1x16xf32>
    %94 = vector.broadcast %93 : vector<1x16xf32> to vector<16x16xf32>
    %95 = arith.mulf %9, %94 : vector<16x16xf32>
    %cst_56 = arith.constant dense<0.000000e+00> : vector<16xf32>
    %96 = vector.multi_reduction <add>, %95, %cst_56 [1] : vector<16x16xf32> to vector<16xf32>
    %97 = vector.shape_cast %96 : vector<16xf32> to vector<16x1xf32>
    %c0_57 = arith.constant 0 : index
    %c0_58 = arith.constant 0 : index
    %98 = vector.load %arg26[%c0_57, %c0_58] : memref<1x1xf32, #tpu.memory_space<vmem>>, vector<1x1xf32>
    %99 = vector.broadcast %98 : vector<1x1xf32> to vector<16x1xf32>
    %100 = arith.addf %97, %99 : vector<16x1xf32>
    %101 = arith.negf %100 : vector<16x1xf32>
    %102 = math.exp %101 : vector<16x1xf32>
    %cst_59 = arith.constant 1.000000e+00 : f32
    %103 = vector.broadcast %cst_59 : f32 to vector<16x1xf32>
    %104 = arith.addf %103, %102 : vector<16x1xf32>
    %105 = arith.divf %103, %104 : vector<16x1xf32>
    %106 = vector.broadcast %105 : vector<16x1xf32> to vector<16x128xf32>
    %107 = arith.mulf %92, %106 : vector<16x128xf32>
    %c0_60 = arith.constant 0 : index
    %c0_61 = arith.constant 0 : index
    %108 = vector.load %arg19[%c0_60, %c0_61] : memref<128x128xbf16, #tpu.memory_space<vmem>>, vector<128x128xbf16>
    %cst_62 = arith.constant dense<0.000000e+00> : vector<16x128xf32>
    %109 = tpu.matmul %6, %108, %cst_62 {dimension_numbers = #tpu.dot_dimension_numbers<[1], [0], [0], [1], [0, 0, 1, 1], [], []>} : vector<16x128xbf16>, vector<128x128xbf16>, vector<16x128xf32> -> vector<16x128xf32>
    %c0_63 = arith.constant 0 : index
    %c0_64 = arith.constant 0 : index
    %110 = vector.load %arg20[%c0_63, %c0_64] : memref<1x128xf32, #tpu.memory_space<vmem>>, vector<1x128xf32>
    %111 = vector.broadcast %110 : vector<1x128xf32> to vector<16x128xf32>
    %112 = arith.addf %109, %111 : vector<16x128xf32>
    %c0_65 = arith.constant 0 : index
    %c0_66 = arith.constant 0 : index
    %113 = vector.load %arg21[%c0_65, %c0_66] : memref<1x128xf32, #tpu.memory_space<vmem>>, vector<1x128xf32>
    %c0_67 = arith.constant 0 : index
    %c0_68 = arith.constant 0 : index
    %114 = vector.load %arg22[%c0_67, %c0_68] : memref<1x128xf32, #tpu.memory_space<vmem>>, vector<1x128xf32>
    %cst_69 = arith.constant dense<0.000000e+00> : vector<16xf32>
    %115 = vector.multi_reduction <add>, %112, %cst_69 [1] : vector<16x128xf32> to vector<16xf32>
    %116 = vector.shape_cast %115 : vector<16xf32> to vector<16x1xf32>
    %cst_70 = arith.constant 1.280000e+02 : f32
    %117 = vector.broadcast %cst_70 : f32 to vector<16x1xf32>
    %118 = arith.divf %116, %117 : vector<16x1xf32>
    %119 = vector.broadcast %118 : vector<16x1xf32> to vector<16x128xf32>
    %120 = arith.subf %112, %119 : vector<16x128xf32>
    %121 = arith.mulf %120, %120 : vector<16x128xf32>
    %cst_71 = arith.constant dense<0.000000e+00> : vector<16xf32>
    %122 = vector.multi_reduction <add>, %121, %cst_71 [1] : vector<16x128xf32> to vector<16xf32>
    %123 = vector.shape_cast %122 : vector<16xf32> to vector<16x1xf32>
    %cst_72 = arith.constant 1.280000e+02 : f32
    %124 = vector.broadcast %cst_72 : f32 to vector<16x1xf32>
    %125 = arith.divf %123, %124 : vector<16x1xf32>
    %126 = vector.broadcast %118 : vector<16x1xf32> to vector<16x128xf32>
    %127 = arith.subf %112, %126 : vector<16x128xf32>
    %cst_73 = arith.constant 9.99999974E-6 : f32
    %128 = vector.broadcast %cst_73 : f32 to vector<16x1xf32>
    %129 = arith.addf %125, %128 : vector<16x1xf32>
    %130 = math.rsqrt %129 : vector<16x1xf32>
    %131 = vector.broadcast %130 : vector<16x1xf32> to vector<16x128xf32>
    %132 = arith.mulf %127, %131 : vector<16x128xf32>
    %133 = vector.broadcast %113 : vector<1x128xf32> to vector<16x128xf32>
    %134 = arith.mulf %132, %133 : vector<16x128xf32>
    %135 = vector.broadcast %114 : vector<1x128xf32> to vector<16x128xf32>
    %136 = arith.addf %134, %135 : vector<16x128xf32>
    %cst_74 = arith.constant 0.000000e+00 : f32
    %137 = vector.broadcast %cst_74 : f32 to vector<16x128xf32>
    %138 = arith.maximumf %136, %137 : vector<16x128xf32>
    %139 = arith.truncf %138 : vector<16x128xf32> to vector<16x128xbf16>
    %c0_75 = arith.constant 0 : index
    %c0_76 = arith.constant 0 : index
    %140 = vector.load %arg23[%c0_75, %c0_76] : memref<128x128xbf16, #tpu.memory_space<vmem>>, vector<128x128xbf16>
    %cst_77 = arith.constant dense<0.000000e+00> : vector<16x128xf32>
    %141 = tpu.matmul %139, %140, %cst_77 {dimension_numbers = #tpu.dot_dimension_numbers<[1], [0], [0], [1], [0, 0, 1, 1], [], []>} : vector<16x128xbf16>, vector<128x128xbf16>, vector<16x128xf32> -> vector<16x128xf32>
    %c0_78 = arith.constant 0 : index
    %c0_79 = arith.constant 0 : index
    %142 = vector.load %arg24[%c0_78, %c0_79] : memref<1x128xf32, #tpu.memory_space<vmem>>, vector<1x128xf32>
    %143 = vector.broadcast %142 : vector<1x128xf32> to vector<16x128xf32>
    %144 = arith.addf %141, %143 : vector<16x128xf32>
    %145 = arith.mulf %144, %60 : vector<16x128xf32>
    %c0_80 = arith.constant 0 : index
    %c0_81 = arith.constant 0 : index
    %146 = vector.load %arg27[%c0_80, %c0_81] : memref<128x16xf32, #tpu.memory_space<vmem>>, vector<128x16xf32>
    %cst_82 = arith.constant dense<0.000000e+00> : vector<16x16xf32>
    %147 = tpu.matmul %145, %146, %cst_82 {dimension_numbers = #tpu.dot_dimension_numbers<[1], [0], [0], [1], [0, 0, 1, 1], [], []>} : vector<16x128xf32>, vector<128x16xf32>, vector<16x16xf32> -> vector<16x16xf32>
    %148 = tpu.iota {dimensions = array<i32: 0>} : vector<16x1xi32>
    %149 = vector.broadcast %0 : i32 to vector<16x1xi32>
    %150 = arith.addi %149, %148 : vector<16x1xi32>
    %c50_i32 = arith.constant 50 : i32
    %151 = vector.broadcast %c50_i32 : i32 to vector<16x1xi32>
    %152 = arith.cmpi slt, %150, %151 : vector<16x1xi32>
    %153 = arith.extui %152 : vector<16x1xi1> to vector<16x1xi32>
    %154 = arith.sitofp %153 : vector<16x1xi32> to vector<16x1xf32>
    %155 = math.exp %147 : vector<16x16xf32>
    %156 = vector.broadcast %154 : vector<16x1xf32> to vector<16x16xf32>
    %157 = arith.mulf %155, %156 : vector<16x16xf32>
    %c0_83 = arith.constant 0 : index
    %c0_84 = arith.constant 0 : index
    %158 = vector.load %arg28[%c0_83, %c0_84] : memref<16x128xf32, #tpu.memory_space<vmem>>, vector<16x128xf32>
    %cst_85 = arith.constant dense<0.000000e+00> : vector<16x128xf32>
    %159 = tpu.matmul %157, %158, %cst_85 {dimension_numbers = #tpu.dot_dimension_numbers<[1], [0], [0], [1], [0, 0, 1, 1], [], []>} : vector<16x16xf32>, vector<16x128xf32>, vector<16x128xf32> -> vector<16x128xf32>
    %160 = arith.mulf %159, %107 : vector<16x128xf32>
    %c0_86 = arith.constant 0 : index
    %c0_87 = arith.constant 0 : index
    %161 = vector.load %arg32[%c0_86, %c0_87] : memref<16x256xf32, #tpu.memory_space<vmem>>, vector<16x128xf32>
    tpu.vector_store %arg32[%c0_86, %c0_87], %160 {strides = array<i32>} : memref<16x256xf32, #tpu.memory_space<vmem>>, vector<16x128xf32>,
    %c0_88 = arith.constant 0 : index
    %c128 = arith.constant 128 : index
    %162 = vector.load %arg32[%c0_88, %c128] : memref<16x256xf32, #tpu.memory_space<vmem>>, vector<16x128xf32>
    tpu.vector_store %arg32[%c0_88, %c128], %159 {strides = array<i32>} : memref<16x256xf32, #tpu.memory_space<vmem>>, vector<16x128xf32>,
    %c0_i32_89 = arith.constant 0 : i32
    %c16_i32_90 = arith.constant 16 : i32
    %163 = arith.addi %c0_i32_89, %c16_i32_90 : i32
    %c1_i32_91 = arith.constant 1 : i32
    scf.for %arg33 = %c0_i32_89 to %163 step %c1_i32_91  : i32 {
      %164 = arith.addi %0, %arg33 : i32
      %165 = arith.index_cast %164 : i32 to index
      %166 = memref.load %arg2[%165] : memref<64xi32, #tpu.memory_space<smem>>
      %167 = arith.index_cast %166 : i32 to index
      %c0_93 = arith.constant 0 : index
      %168 = vector.load %arg29[%167, %c0_93] : memref<24x256xf32, #tpu.memory_space<vmem>>, vector<1x256xf32>
      %169 = arith.index_cast %arg33 : i32 to index
      %c0_94 = arith.constant 0 : index
      %170 = vector.load %arg32[%169, %c0_94] : memref<16x256xf32, #tpu.memory_space<vmem>>, vector<1x256xf32>
      %171 = arith.addf %168, %170 : vector<1x256xf32>
      %172 = arith.index_cast %166 : i32 to index
      %c0_95 = arith.constant 0 : index
      %173 = vector.load %arg29[%172, %c0_95] : memref<24x256xf32, #tpu.memory_space<vmem>>, vector<1x256xf32>
      tpu.vector_store %arg29[%172, %c0_95], %171 {strides = array<i32>} : memref<24x256xf32, #tpu.memory_space<vmem>>, vector<1x256xf32>,
    }
    %c16_i32_92 = arith.constant 16 : i32
    return
  }
  func.func @transform_0(%arg0: i32, %arg1: memref<64xi32, #tpu.memory_space<smem>>, %arg2: memref<64xi32, #tpu.memory_space<smem>>) -> (i32, i32) {
    %c0_i32 = arith.constant 0 : i32
    %c0_i32_0 = arith.constant 0 : i32
    %c0_i32_1 = arith.constant 0 : i32
    return %c0_i32, %c0_i32_0 : i32, i32
  }
  func.func @transform_1(%arg0: i32, %arg1: memref<64xi32, #tpu.memory_space<smem>>, %arg2: memref<64xi32, #tpu.memory_space<smem>>) -> (i32, i32) {
    %c0_i32 = arith.constant 0 : i32
    %c0_i32_0 = arith.constant 0 : i32
    return %arg0, %c0_i32 : i32, i32
  }
  func.func @transform_2(%arg0: i32, %arg1: memref<64xi32, #tpu.memory_space<smem>>, %arg2: memref<64xi32, #tpu.memory_space<smem>>) -> (i32, i32) {
    %c0_i32 = arith.constant 0 : i32
    %c0_i32_0 = arith.constant 0 : i32
    return %arg0, %c0_i32 : i32, i32
  }
  func.func @transform_3(%arg0: i32, %arg1: memref<64xi32, #tpu.memory_space<smem>>, %arg2: memref<64xi32, #tpu.memory_space<smem>>) -> (i32, i32) {
    %c0_i32 = arith.constant 0 : i32
    %c0_i32_0 = arith.constant 0 : i32
    %c0_i32_1 = arith.constant 0 : i32
    return %c0_i32, %c0_i32_0 : i32, i32
  }
  func.func @transform_4(%arg0: i32, %arg1: memref<64xi32, #tpu.memory_space<smem>>, %arg2: memref<64xi32, #tpu.memory_space<smem>>) -> (i32, i32) {
    %c0_i32 = arith.constant 0 : i32
    %c0_i32_0 = arith.constant 0 : i32
    %c0_i32_1 = arith.constant 0 : i32
    return %c0_i32, %c0_i32_0 : i32, i32
  }
  func.func @transform_5(%arg0: i32, %arg1: memref<64xi32, #tpu.memory_space<smem>>, %arg2: memref<64xi32, #tpu.memory_space<smem>>) -> (i32, i32) {
    %c0_i32 = arith.constant 0 : i32
    %c0_i32_0 = arith.constant 0 : i32
    %c0_i32_1 = arith.constant 0 : i32
    return %c0_i32, %c0_i32_0 : i32, i32
  }
  func.func @transform_6(%arg0: i32, %arg1: memref<64xi32, #tpu.memory_space<smem>>, %arg2: memref<64xi32, #tpu.memory_space<smem>>) -> (i32, i32) {
    %c0_i32 = arith.constant 0 : i32
    %c0_i32_0 = arith.constant 0 : i32
    %c0_i32_1 = arith.constant 0 : i32
    return %c0_i32, %c0_i32_0 : i32, i32
  }
  func.func @transform_7(%arg0: i32, %arg1: memref<64xi32, #tpu.memory_space<smem>>, %arg2: memref<64xi32, #tpu.memory_space<smem>>) -> (i32, i32) {
    %c0_i32 = arith.constant 0 : i32
    %c0_i32_0 = arith.constant 0 : i32
    %c0_i32_1 = arith.constant 0 : i32
    return %c0_i32, %c0_i32_0 : i32, i32
  }
  func.func @transform_8(%arg0: i32, %arg1: memref<64xi32, #tpu.memory_space<smem>>, %arg2: memref<64xi32, #tpu.memory_space<smem>>) -> (i32, i32) {
    %c0_i32 = arith.constant 0 : i32
    %c0_i32_0 = arith.constant 0 : i32
    %c0_i32_1 = arith.constant 0 : i32
    return %c0_i32, %c0_i32_0 : i32, i32
  }
  func.func @transform_9(%arg0: i32, %arg1: memref<64xi32, #tpu.memory_space<smem>>, %arg2: memref<64xi32, #tpu.memory_space<smem>>) -> (i32, i32) {
    %c0_i32 = arith.constant 0 : i32
    %c0_i32_0 = arith.constant 0 : i32
    %c0_i32_1 = arith.constant 0 : i32
    return %c0_i32, %c0_i32_0 : i32, i32
  }
  func.func @transform_10(%arg0: i32, %arg1: memref<64xi32, #tpu.memory_space<smem>>, %arg2: memref<64xi32, #tpu.memory_space<smem>>) -> (i32, i32) {
    %c0_i32 = arith.constant 0 : i32
    %c0_i32_0 = arith.constant 0 : i32
    %c0_i32_1 = arith.constant 0 : i32
    return %c0_i32, %c0_i32_0 : i32, i32
  }
  func.func @transform_11(%arg0: i32, %arg1: memref<64xi32, #tpu.memory_space<smem>>, %arg2: memref<64xi32, #tpu.memory_space<smem>>) -> (i32, i32) {
    %c0_i32 = arith.constant 0 : i32
    %c0_i32_0 = arith.constant 0 : i32
    %c0_i32_1 = arith.constant 0 : i32
    return %c0_i32, %c0_i32_0 : i32, i32
  }
  func.func @transform_12(%arg0: i32, %arg1: memref<64xi32, #tpu.memory_space<smem>>, %arg2: memref<64xi32, #tpu.memory_space<smem>>) -> (i32, i32) {
    %c0_i32 = arith.constant 0 : i32
    %c0_i32_0 = arith.constant 0 : i32
    %c0_i32_1 = arith.constant 0 : i32
    return %c0_i32, %c0_i32_0 : i32, i32
  }
  func.func @transform_13(%arg0: i32, %arg1: memref<64xi32, #tpu.memory_space<smem>>, %arg2: memref<64xi32, #tpu.memory_space<smem>>) -> (i32, i32) {
    %c0_i32 = arith.constant 0 : i32
    %c0_i32_0 = arith.constant 0 : i32
    %c0_i32_1 = arith.constant 0 : i32
    return %c0_i32, %c0_i32_0 : i32, i32
  }
  func.func @transform_14(%arg0: i32, %arg1: memref<64xi32, #tpu.memory_space<smem>>, %arg2: memref<64xi32, #tpu.memory_space<smem>>) -> (i32, i32) {
    %c0_i32 = arith.constant 0 : i32
    %c0_i32_0 = arith.constant 0 : i32
    %c0_i32_1 = arith.constant 0 : i32
    return %c0_i32, %c0_i32_0 : i32, i32
  }
  func.func @transform_15(%arg0: i32, %arg1: memref<64xi32, #tpu.memory_space<smem>>, %arg2: memref<64xi32, #tpu.memory_space<smem>>) -> (i32, i32) {
    %c0_i32 = arith.constant 0 : i32
    %c0_i32_0 = arith.constant 0 : i32
    %c0_i32_1 = arith.constant 0 : i32
    return %c0_i32, %c0_i32_0 : i32, i32
  }
  func.func @transform_16(%arg0: i32, %arg1: memref<64xi32, #tpu.memory_space<smem>>, %arg2: memref<64xi32, #tpu.memory_space<smem>>) -> (i32, i32) {
    %c0_i32 = arith.constant 0 : i32
    %c0_i32_0 = arith.constant 0 : i32
    %c0_i32_1 = arith.constant 0 : i32
    return %c0_i32, %c0_i32_0 : i32, i32
  }
  func.func @transform_17(%arg0: i32, %arg1: memref<64xi32, #tpu.memory_space<smem>>, %arg2: memref<64xi32, #tpu.memory_space<smem>>) -> (i32, i32) {
    %c0_i32 = arith.constant 0 : i32
    %c0_i32_0 = arith.constant 0 : i32
    %c0_i32_1 = arith.constant 0 : i32
    return %c0_i32, %c0_i32_0 : i32, i32
  }
  func.func @transform_18(%arg0: i32, %arg1: memref<64xi32, #tpu.memory_space<smem>>, %arg2: memref<64xi32, #tpu.memory_space<smem>>) -> (i32, i32) {
    %c0_i32 = arith.constant 0 : i32
    %c0_i32_0 = arith.constant 0 : i32
    %c0_i32_1 = arith.constant 0 : i32
    return %c0_i32, %c0_i32_0 : i32, i32
  }
  func.func @transform_19(%arg0: i32, %arg1: memref<64xi32, #tpu.memory_space<smem>>, %arg2: memref<64xi32, #tpu.memory_space<smem>>) -> (i32, i32) {
    %c0_i32 = arith.constant 0 : i32
    %c0_i32_0 = arith.constant 0 : i32
    %c0_i32_1 = arith.constant 0 : i32
    return %c0_i32, %c0_i32_0 : i32, i32
  }
  func.func @transform_20(%arg0: i32, %arg1: memref<64xi32, #tpu.memory_space<smem>>, %arg2: memref<64xi32, #tpu.memory_space<smem>>) -> (i32, i32) {
    %c0_i32 = arith.constant 0 : i32
    %c0_i32_0 = arith.constant 0 : i32
    %c0_i32_1 = arith.constant 0 : i32
    return %c0_i32, %c0_i32_0 : i32, i32
  }
  func.func @transform_21(%arg0: i32, %arg1: memref<64xi32, #tpu.memory_space<smem>>, %arg2: memref<64xi32, #tpu.memory_space<smem>>) -> (i32, i32) {
    %c0_i32 = arith.constant 0 : i32
    %c0_i32_0 = arith.constant 0 : i32
    %c0_i32_1 = arith.constant 0 : i32
    return %c0_i32, %c0_i32_0 : i32, i32
  }
  func.func @transform_22(%arg0: i32, %arg1: memref<64xi32, #tpu.memory_space<smem>>, %arg2: memref<64xi32, #tpu.memory_space<smem>>) -> (i32, i32) {
    %c0_i32 = arith.constant 0 : i32
    %c0_i32_0 = arith.constant 0 : i32
    %c0_i32_1 = arith.constant 0 : i32
    return %c0_i32, %c0_i32_0 : i32, i32
  }
  func.func @transform_23(%arg0: i32, %arg1: memref<64xi32, #tpu.memory_space<smem>>, %arg2: memref<64xi32, #tpu.memory_space<smem>>) -> (i32, i32) {
    %c0_i32 = arith.constant 0 : i32
    %c0_i32_0 = arith.constant 0 : i32
    %c0_i32_1 = arith.constant 0 : i32
    return %c0_i32, %c0_i32_0 : i32, i32
  }
  func.func @transform_24(%arg0: i32, %arg1: memref<64xi32, #tpu.memory_space<smem>>, %arg2: memref<64xi32, #tpu.memory_space<smem>>) -> (i32, i32) {
    %c0_i32 = arith.constant 0 : i32
    %c0_i32_0 = arith.constant 0 : i32
    %c0_i32_1 = arith.constant 0 : i32
    return %c0_i32, %c0_i32_0 : i32, i32
  }
  func.func @transform_25(%arg0: i32, %arg1: memref<64xi32, #tpu.memory_space<smem>>, %arg2: memref<64xi32, #tpu.memory_space<smem>>) -> (i32, i32) {
    %c0_i32 = arith.constant 0 : i32
    %c0_i32_0 = arith.constant 0 : i32
    %c0_i32_1 = arith.constant 0 : i32
    return %c0_i32, %c0_i32_0 : i32, i32
  }
  func.func @transform_26(%arg0: i32, %arg1: memref<64xi32, #tpu.memory_space<smem>>, %arg2: memref<64xi32, #tpu.memory_space<smem>>) -> (i32, i32) {
    %c0_i32 = arith.constant 0 : i32
    %c0_i32_0 = arith.constant 0 : i32
    %c0_i32_1 = arith.constant 0 : i32
    return %c0_i32, %c0_i32_0 : i32, i32
  }
}

</mosaic_0001>

<llo_original>
// kernel: tpu_custom_call.1
$region0: #{tpu_custom_call.1}
  #allocation0 [shape = 'u32[]', space=smem, size = 0x4, offset = 0x4, fixed_abs, tag = 'smem constant byte address 0x4 - core index']
  #allocation1 [shape = 'u32[144,128]{1,0:T(1,128)}', space=vmem, size = 0x12000, scoped, tag = 'internal scratch']
  #allocation2 [shape = 'f32[16,128]{1,0:T(8,128)}', space=vmem, size = 0x2000, scoped, tag = 'scratch operand']
  #allocation3 [shape = 'f32[16,128]{1,0:T(8,128)}', space=vmem, size = 0x2000, scoped, tag = 'scratch operand']
  #allocation4 [shape = 'f32[16,256]{1,0:T(8,128)}', space=vmem, size = 0x4000, scoped, tag = 'scratch operand']
  #allocation5 [shape = 's32[1]{0}', space=sflag, size = 0x4, scoped, tag = 'scoped memory for tpu_custom_call.1']
  #allocation6 [shape = 'u8[512]{0}', space=smem, size = 0x200, scoped, tag = 'prefetched SMEM operand 0']
  #allocation7 [shape = 'u8[512]{0}', space=smem, size = 0x200, scoped, tag = 'prefetched SMEM operand 1']
  #allocation8 [shape = 'f32[1,1]{1,0:T(1,128)S(1)}', space=vmem, size = 0x200, scoped, tag = 'scoped memory for tpu_custom_call.1']
  %s0 = inlined_call_operand.hbm [shape: s32[64], index: 0, kind: input, shape index: {}]
  %s1 = inlined_call_operand.hbm [shape: s32[64], index: 1, kind: input, shape index: {}]
  %s2 = inlined_call_operand.hbm [shape: f32[24,128], index: 2, kind: input, shape index: {}]
  %s3 = inlined_call_operand.vmem [shape: f32[64,16], index: 3, kind: input, shape index: {}]
  %s4 = inlined_call_operand.vmem [shape: f32[64,4], index: 4, kind: input, shape index: {}]
  %s5 = inlined_call_operand.hbm [shape: bf16[4,256], index: 5, kind: input, shape index: {}]
  %s6 = inlined_call_operand.hbm [shape: bf16[16,256], index: 6, kind: input, shape index: {}]
  %s7 = inlined_call_operand.vmem [shape: bf16[128,256], index: 7, kind: input, shape index: {}]
  %s8 = inlined_call_operand.vmem [shape: bf16[128,256], index: 8, kind: input, shape index: {}]
  %s9 = inlined_call_operand.hbm [shape: f32[1,256], index: 9, kind: input, shape index: {}]
  %s10 = inlined_call_operand.hbm [shape: f32[1,128], index: 10, kind: input, shape index: {}]
  %s11 = inlined_call_operand.hbm [shape: f32[1,128], index: 11, kind: input, shape index: {}]
  %s12 = inlined_call_operand.hbm [shape: f32[1,128], index: 12, kind: input, shape index: {}]
  %s13 = inlined_call_operand.hbm [shape: f32[1,128], index: 13, kind: input, shape index: {}]
  %s14 = inlined_call_operand.vmem [shape: bf16[128,128], index: 14, kind: input, shape index: {}]
  %s15 = inlined_call_operand.hbm [shape: f32[1,128], index: 15, kind: input, shape index: {}]
  %s16 = inlined_call_operand.hbm [shape: bf16[128,128], index: 16, kind: input, shape index: {}]
  %s17 = inlined_call_operand.vmem [shape: f32[1,128], index: 17, kind: input, shape index: {}]
  %s18 = inlined_call_operand.hbm [shape: bf16[128,128], index: 18, kind: input, shape index: {}]
  %s19 = inlined_call_operand.vmem [shape: f32[1,128], index: 19, kind: input, shape index: {}]
  %s20 = inlined_call_operand.vmem [shape: f32[1,128], index: 20, kind: input, shape index: {}]
  %s21 = inlined_call_operand.vmem [shape: f32[1,128], index: 21, kind: input, shape index: {}]
  %s22 = inlined_call_operand.hbm [shape: bf16[128,128], index: 22, kind: input, shape index: {}]
  %s23 = inlined_call_operand.vmem [shape: f32[1,128], index: 23, kind: input, shape index: {}]
  %s24 = inlined_call_operand.vmem [shape: f32[1,16], index: 24, kind: input, shape index: {}]
  %s25 = inlined_call_operand.<no memory space> [shape: f32[1,1], index: 25, kind: input, shape index: {}]
  %s26 = inlined_call_operand.vmem [shape: f32[128,16], index: 26, kind: input, shape index: {}]
  %s27 = inlined_call_operand.vmem [shape: f32[16,128], index: 27, kind: input, shape index: {}]
  %s28 = inlined_call_operand.hbm [shape: f32[24,256], index: 28, kind: output, shape index: {}]
  %s29 = sld [smem:[#allocation0]]
  $region203: #{tpu_custom_call.1} parent=0
    _
  %s31 = ssub.s32 1, %s29
  %s32 = scalar_select 0, %s31, %s29
  %34 = dma.hbm_to_smem %s0, 16, [#allocation6], [#allocation5]
  %36 = dma.hbm_to_smem %s1, 16, [#allocation7], [#allocation5]
  %v37 = vstv %s25
  %38 = vst [vmem:[#allocation8] sm:$0x1] %v37
  %39 = dma.done [#allocation5], 32
  %40 = sfence
  $region1: #{tpu_custom_call.1} parent=0
    #allocation9 [shape = 'u8[12288]{0}', space=vmem, size = 0x3000, scoped, tag = 'input window, operand 2, single buffered']
    #allocation10 [shape = 's32[2]{0}', space=sflag, size = 0x8, scoped, tag = 'scoped memory for tpu_custom_call.1']
    #allocation11 [shape = 's32[2]{0}', space=sflag, size = 0x8, scoped, tag = 'scoped memory for tpu_custom_call.1']
    #allocation12 [shape = 'u8[2048]{0}', space=vmem, size = 0x800, scoped, tag = 'input window, operand 5, single buffered']
    #allocation13 [shape = 's32[1]{0}', space=sflag, size = 0x4, scoped, tag = 'scoped memory for tpu_custom_call.1']
    #allocation14 [shape = 'u8[8192]{0}', space=vmem, size = 0x2000, scoped, tag = 'input window, operand 6, single buffered']
    #allocation15 [shape = 'u8[1024]{0}', space=vmem, size = 0x400, scoped, tag = 'input window, operand 9, single buffered']
    #allocation16 [shape = 's32[1]{0}', space=sflag, size = 0x4, scoped, tag = 'scoped memory for tpu_custom_call.1']
    #allocation17 [shape = 'u8[512]{0}', space=vmem, size = 0x400, scoped, tag = 'input window, operand 10, single buffered']
    #allocation18 [shape = 'u8[512]{0}', space=vmem, size = 0x400, scoped, tag = 'input window, operand 11, single buffered']
    #allocation19 [shape = 's32[1]{0}', space=sflag, size = 0x4, scoped, tag = 'scoped memory for tpu_custom_call.1']
    #allocation20 [shape = 'u8[512]{0}', space=vmem, size = 0x400, scoped, tag = 'input window, operand 12, single buffered']
    #allocation21 [shape = 'u8[512]{0}', space=vmem, size = 0x400, scoped, tag = 'input window, operand 13, single buffered']
    #allocation22 [shape = 's32[1]{0}', space=sflag, size = 0x4, scoped, tag = 'scoped memory for tpu_custom_call.1']
    #allocation23 [shape = 'u8[512]{0}', space=vmem, size = 0x400, scoped, tag = 'input window, operand 15, single buffered']
    #allocation24 [shape = 'u8[32768]{0}', space=vmem, size = 0x8000, scoped, tag = 'input window, operand 16, single buffered']
    #allocation25 [shape = 's32[1]{0}', space=sflag, size = 0x4, scoped, tag = 'scoped memory for tpu_custom_call.1']
    #allocation26 [shape = 'u8[32768]{0}', space=vmem, size = 0x8000, scoped, tag = 'input window, operand 18, single buffered']
    #allocation27 [shape = 'u8[32768]{0}', space=vmem, size = 0x8000, scoped, tag = 'input window, operand 22, single buffered']
    #allocation28 [shape = 's32[1]{0}', space=sflag, size = 0x4, scoped, tag = 'scoped memory for tpu_custom_call.1']
    #allocation29 [shape = 'u8[24576]{0}', space=vmem, size = 0x6000, scoped, tag = 'output window, operand 0, single buffered']
    %41 = vsyncpa [#allocation10], 0
    %42 = vsyncpa [#allocation13], 0
    %43 = vsyncpa [#allocation16], 0
    %44 = vsyncpa [#allocation19], 0
    %45 = vsyncpa [#allocation22], 0
    %46 = vsyncpa [#allocation25], 0
    %47 = vsyncpa [#allocation28], 0
    %48 = vsyncpa [#allocation11], 0
    loop: start=0, step=1, limit=6
    $region2: #{tpu_custom_call.1} parent=1 // loop_pre_header
      _
    $region3: #{tpu_custom_call.1} parent=1 // loop_header
      %s50 = sphi 0, %s54
      %p51 = scmp.ge.s32.totalorder %s50, 6
      %s58 = sphi 0, %s58
      %s60 = sphi 0, %s58
      %s61 = sphi 0, %s60
      %s75 = sphi 0, %s61
      %s81 = sphi 0, %s83
      %s84 = sphi 0, %s81
      %s85 = sphi 0, %s84
      %s101 = sphi 0, %s85
      %s107 = sphi 0, %s109
      %s110 = sphi 0, %s107
      %s111 = sphi 0, %s110
      %s127 = sphi 0, %s111
      %s131 = sphi 0, %s131
      %s133 = sphi 0, %s131
      %s134 = sphi 0, %s133
      %s148 = sphi 0, %s134
      %s152 = sphi 0, %s152
      %s154 = sphi 0, %s152
      %s155 = sphi 0, %s154
      %s169 = sphi 0, %s155
      %s173 = sphi 0, %s173
      %s175 = sphi 0, %s173
      %s176 = sphi 0, %s175
      %s190 = sphi 0, %s176
      %s194 = sphi 0, %s194
      %s196 = sphi 0, %s194
      %s197 = sphi 0, %s196
      %s211 = sphi 0, %s197
      %s215 = sphi 0, %s215
      %s217 = sphi 0, %s215
      %s218 = sphi 0, %s217
      %s232 = sphi 0, %s218
      %s236 = sphi 0, %s236
      %s238 = sphi 0, %s236
      %s239 = sphi 0, %s238
      %s253 = sphi 0, %s239
      %s257 = sphi 0, %s257
      %s259 = sphi 0, %s257
      %s260 = sphi 0, %s259
      %s274 = sphi 0, %s260
      %s278 = sphi 0, %s278
      %s280 = sphi 0, %s278
      %s281 = sphi 0, %s280
      %s295 = sphi 0, %s281
      %s299 = sphi 0, %s299
      %s301 = sphi 0, %s299
      %s302 = sphi 0, %s301
      %s316 = sphi 0, %s302
      %s320 = sphi 0, %s320
      %s322 = sphi 0, %s320
      %s323 = sphi 0, %s322
      %s337 = sphi 0, %s323
      %s341 = sphi 0, %s341
      %s343 = sphi 0, %s341
      %s344 = sphi 0, %s343
      %s358 = sphi 0, %s344
      %s362 = sphi 0, %s362
      %s364 = sphi 0, %s362
      %s365 = sphi 0, %s364
      %s379 = sphi 0, %s365
      %s383 = sphi 0, %s383
      %s385 = sphi 0, %s383
      %s386 = sphi 0, %s385
      %s400 = sphi 0, %s386
      %s404 = sphi 0, %s404
      %s406 = sphi 0, %s404
      %s407 = sphi 0, %s406
      %s421 = sphi 0, %s407
      %s425 = sphi 0, %s425
      %s427 = sphi 0, %s425
      %s428 = sphi 0, %s427
      %s442 = sphi 0, %s428
      %s446 = sphi 0, %s446
      %s448 = sphi 0, %s446
      %s449 = sphi 0, %s448
      %s463 = sphi 0, %s449
      %s467 = sphi 0, %s467
      %s469 = sphi 0, %s467
      %s470 = sphi 0, %s469
      %s484 = sphi 0, %s470
      %s488 = sphi 0, %s488
      %s490 = sphi 0, %s488
      %s491 = sphi 0, %s490
      %s505 = sphi 0, %s491
      %s509 = sphi 0, %s509
      %s511 = sphi 0, %s509
      %s512 = sphi 0, %s511
      %s526 = sphi 0, %s512
      %s530 = sphi 0, %s530
      %s532 = sphi 0, %s530
      %s533 = sphi 0, %s532
      %s547 = sphi 0, %s533
      %s551 = sphi 0, %s551
      %s553 = sphi 0, %s551
      %s554 = sphi 0, %s553
      %s568 = sphi 0, %s554
      %s572 = sphi 0, %s572
      %s574 = sphi 0, %s572
      %s575 = sphi 0, %s574
      %s589 = sphi 0, %s575
      %s593 = sphi 0, %s593
      %s595 = sphi 0, %s593
      %s596 = sphi 0, %s595
      %s610 = sphi 0, %s596
      %s614 = sphi 0, %s614
      %s616 = sphi 0, %s614
      %s617 = sphi 0, %s616
      %s631 = sphi 0, %s617
    $region4: #{tpu_custom_call.1} parent=1 // loop_header_branch
      %53 = sbr.rel (%p51) target = $region8
    $region5: #{tpu_custom_call.1} parent=1 // loop_body
      %s55 = ssub.s32 %s50, 1
      %s56 = ssub.s32 %s50, 2
      %s57 = sadd.s32 %s50, 1
      %s59 = sadd.s32 %s58, 1
      %p62 = scmp.eq.s32.totalorder %s50, 3
      %p63 = scmp.ne.s32.totalorder %s58, %s60
      %p64 = scmp.eq.s32.totalorder %s50, 0
      %p65 = por %p63, %p64
      %p66 = scmp.ne.s32.totalorder %s58, %s60
      %p67 = scmp.eq.s32.totalorder %s55, 3
      %p68 = por %p66, %p67
      %p69 = scmp.ne.s32.totalorder %s60, %s61
      %p70 = scmp.eq.s32.totalorder %s55, 0
      %p71 = por %p69, %p70
      %p72 = scmp.ne.s32.totalorder %s60, %s61
      %p73 = scmp.eq.s32.totalorder %s56, 3
      %p74 = por %p72, %p73
      %p76 = scmp.ne.s32.totalorder %s61, %s75
      %p77 = scmp.eq.s32.totalorder %s56, 0
      %p78 = por %p76, %p77
      %s79 = ssub.s32 %s50, %s57
      %p80 = scmp.eq.s32.totalorder %s79, 0
      %s82 = sadd.s32 %s81, 1
      %s83 = scalar_select %p80, %s81, %s82
      %p86 = pneg %p80
      %p87 = scmp.eq.s32.totalorder %s50, 3
      %p88 = por %p86, %p87
      %p89 = scmp.ne.s32.totalorder %s81, %s84
      %p90 = scmp.eq.s32.totalorder %s50, 0
      %p91 = por %p89, %p90
      %p92 = scmp.ne.s32.totalorder %s81, %s84
      %p93 = scmp.eq.s32.totalorder %s55, 3
      %p94 = por %p92, %p93
      %p95 = scmp.ne.s32.totalorder %s84, %s85
      %p96 = scmp.eq.s32.totalorder %s55, 0
      %p97 = por %p95, %p96
      %p98 = scmp.ne.s32.totalorder %s84, %s85
      %p99 = scmp.eq.s32.totalorder %s56, 3
      %p100 = por %p98, %p99
      %p102 = scmp.ne.s32.totalorder %s85, %s101
      %p103 = scmp.eq.s32.totalorder %s56, 0
      %p104 = por %p102, %p103
      %s105 = ssub.s32 %s50, %s57
      %p106 = scmp.eq.s32.totalorder %s105, 0
      %s108 = sadd.s32 %s107, 1
      %s109 = scalar_select %p106, %s107, %s108
      %p112 = pneg %p106
      %p113 = scmp.eq.s32.totalorder %s50, 3
      %p114 = por %p112, %p113
      %p115 = scmp.ne.s32.totalorder %s107, %s110
      %p116 = scmp.eq.s32.totalorder %s50, 0
      %p117 = por %p115, %p116
      %p118 = scmp.ne.s32.totalorder %s107, %s110
      %p119 = scmp.eq.s32.totalorder %s55, 3
      %p120 = por %p118, %p119
      %p121 = scmp.ne.s32.totalorder %s110, %s111
      %p122 = scmp.eq.s32.totalorder %s55, 0
      %p123 = por %p121, %p122
      %p124 = scmp.ne.s32.totalorder %s110, %s111
      %p125 = scmp.eq.s32.totalorder %s56, 3
      %p126 = por %p124, %p125
      %p128 = scmp.ne.s32.totalorder %s111, %s127
      %p129 = scmp.eq.s32.totalorder %s56, 0
      %p130 = por %p128, %p129
      %s132 = sadd.s32 %s131, 1
      %p135 = scmp.eq.s32.totalorder %s50, 3
      %p136 = scmp.ne.s32.totalorder %s131, %s133
      %p137 = scmp.eq.s32.totalorder %s50, 0
      %p138 = por %p136, %p137
      %p139 = scmp.ne.s32.totalorder %s131, %s133
      %p140 = scmp.eq.s32.totalorder %s55, 3
      %p141 = por %p139, %p140
      %p142 = scmp.ne.s32.totalorder %s133, %s134
      %p143 = scmp.eq.s32.totalorder %s55, 0
      %p144 = por %p142, %p143
      %p145 = scmp.ne.s32.totalorder %s133, %s134
      %p146 = scmp.eq.s32.totalorder %s56, 3
      %p147 = por %p145, %p146
      %p149 = scmp.ne.s32.totalorder %s134, %s148
      %p150 = scmp.eq.s32.totalorder %s56, 0
      %p151 = por %p149, %p150
      %s153 = sadd.s32 %s152, 1
      %p156 = scmp.eq.s32.totalorder %s50, 3
      %p157 = scmp.ne.s32.totalorder %s152, %s154
      %p158 = scmp.eq.s32.totalorder %s50, 0
      %p159 = por %p157, %p158
      %p160 = scmp.ne.s32.totalorder %s152, %s154
      %p161 = scmp.eq.s32.totalorder %s55, 3
      %p162 = por %p160, %p161
      %p163 = scmp.ne.s32.totalorder %s154, %s155
      %p164 = scmp.eq.s32.totalorder %s55, 0
      %p165 = por %p163, %p164
      %p166 = scmp.ne.s32.totalorder %s154, %s155
      %p167 = scmp.eq.s32.totalorder %s56, 3
      %p168 = por %p166, %p167
      %p170 = scmp.ne.s32.totalorder %s155, %s169
      %p171 = scmp.eq.s32.totalorder %s56, 0
      %p172 = por %p170, %p171
      %s174 = sadd.s32 %s173, 1
      %p177 = scmp.eq.s32.totalorder %s50, 3
      %p178 = scmp.ne.s32.totalorder %s173, %s175
      %p179 = scmp.eq.s32.totalorder %s50, 0
      %p180 = por %p178, %p179
      %p181 = scmp.ne.s32.totalorder %s173, %s175
      %p182 = scmp.eq.s32.totalorder %s55, 3
      %p183 = por %p181, %p182
      %p184 = scmp.ne.s32.totalorder %s175, %s176
      %p185 = scmp.eq.s32.totalorder %s55, 0
      %p186 = por %p184, %p185
      %p187 = scmp.ne.s32.totalorder %s175, %s176
      %p188 = scmp.eq.s32.totalorder %s56, 3
      %p189 = por %p187, %p188
      %p191 = scmp.ne.s32.totalorder %s176, %s190
      %p192 = scmp.eq.s32.totalorder %s56, 0
      %p193 = por %p191, %p192
      %s195 = sadd.s32 %s194, 1
      %p198 = scmp.eq.s32.totalorder %s50, 3
      %p199 = scmp.ne.s32.totalorder %s194, %s196
      %p200 = scmp.eq.s32.totalorder %s50, 0
      %p201 = por %p199, %p200
      %p202 = scmp.ne.s32.totalorder %s194, %s196
      %p203 = scmp.eq.s32.totalorder %s55, 3
      %p204 = por %p202, %p203
      %p205 = scmp.ne.s32.totalorder %s196, %s197
      %p206 = scmp.eq.s32.totalorder %s55, 0
      %p207 = por %p205, %p206
      %p208 = scmp.ne.s32.totalorder %s196, %s197
      %p209 = scmp.eq.s32.totalorder %s56, 3
      %p210 = por %p208, %p209
      %p212 = scmp.ne.s32.totalorder %s197, %s211
      %p213 = scmp.eq.s32.totalorder %s56, 0
      %p214 = por %p212, %p213
      %s216 = sadd.s32 %s215, 1
      %p219 = scmp.eq.s32.totalorder %s50, 3
      %p220 = scmp.ne.s32.totalorder %s215, %s217
      %p221 = scmp.eq.s32.totalorder %s50, 0
      %p222 = por %p220, %p221
      %p223 = scmp.ne.s32.totalorder %s215, %s217
      %p224 = scmp.eq.s32.totalorder %s55, 3
      %p225 = por %p223, %p224
      %p226 = scmp.ne.s32.totalorder %s217, %s218
      %p227 = scmp.eq.s32.totalorder %s55, 0
      %p228 = por %p226, %p227
      %p229 = scmp.ne.s32.totalorder %s217, %s218
      %p230 = scmp.eq.s32.totalorder %s56, 3
      %p231 = por %p229, %p230
      %p233 = scmp.ne.s32.totalorder %s218, %s232
      %p234 = scmp.eq.s32.totalorder %s56, 0
      %p235 = por %p233, %p234
      %s237 = sadd.s32 %s236, 1
      %p240 = scmp.eq.s32.totalorder %s50, 3
      %p241 = scmp.ne.s32.totalorder %s236, %s238
      %p242 = scmp.eq.s32.totalorder %s50, 0
      %p243 = por %p241, %p242
      %p244 = scmp.ne.s32.totalorder %s236, %s238
      %p245 = scmp.eq.s32.totalorder %s55, 3
      %p246 = por %p244, %p245
      %p247 = scmp.ne.s32.totalorder %s238, %s239
      %p248 = scmp.eq.s32.totalorder %s55, 0
      %p249 = por %p247, %p248
      %p250 = scmp.ne.s32.totalorder %s238, %s239
      %p251 = scmp.eq.s32.totalorder %s56, 3
      %p252 = por %p250, %p251
      %p254 = scmp.ne.s32.totalorder %s239, %s253
      %p255 = scmp.eq.s32.totalorder %s56, 0
      %p256 = por %p254, %p255
      %s258 = sadd.s32 %s257, 1
      %p261 = scmp.eq.s32.totalorder %s50, 3
      %p262 = scmp.ne.s32.totalorder %s257, %s259
      %p263 = scmp.eq.s32.totalorder %s50, 0
      %p264 = por %p262, %p263
      %p265 = scmp.ne.s32.totalorder %s257, %s259
      %p266 = scmp.eq.s32.totalorder %s55, 3
      %p267 = por %p265, %p266
      %p268 = scmp.ne.s32.totalorder %s259, %s260
      %p269 = scmp.eq.s32.totalorder %s55, 0
      %p270 = por %p268, %p269
      %p271 = scmp.ne.s32.totalorder %s259, %s260
      %p272 = scmp.eq.s32.totalorder %s56, 3
      %p273 = por %p271, %p272
      %p275 = scmp.ne.s32.totalorder %s260, %s274
      %p276 = scmp.eq.s32.totalorder %s56, 0
      %p277 = por %p275, %p276
      %s279 = sadd.s32 %s278, 1
      %p282 = scmp.eq.s32.totalorder %s50, 3
      %p283 = scmp.ne.s32.totalorder %s278, %s280
      %p284 = scmp.eq.s32.totalorder %s50, 0
      %p285 = por %p283, %p284
      %p286 = scmp.ne.s32.totalorder %s278, %s280
      %p287 = scmp.eq.s32.totalorder %s55, 3
      %p288 = por %p286, %p287
      %p289 = scmp.ne.s32.totalorder %s280, %s281
      %p290 = scmp.eq.s32.totalorder %s55, 0
      %p291 = por %p289, %p290
      %p292 = scmp.ne.s32.totalorder %s280, %s281
      %p293 = scmp.eq.s32.totalorder %s56, 3
      %p294 = por %p292, %p293
      %p296 = scmp.ne.s32.totalorder %s281, %s295
      %p297 = scmp.eq.s32.totalorder %s56, 0
      %p298 = por %p296, %p297
      %s300 = sadd.s32 %s299, 1
      %p303 = scmp.eq.s32.totalorder %s50, 3
      %p304 = scmp.ne.s32.totalorder %s299, %s301
      %p305 = scmp.eq.s32.totalorder %s50, 0
      %p306 = por %p304, %p305
      %p307 = scmp.ne.s32.totalorder %s299, %s301
      %p308 = scmp.eq.s32.totalorder %s55, 3
      %p309 = por %p307, %p308
      %p310 = scmp.ne.s32.totalorder %s301, %s302
      %p311 = scmp.eq.s32.totalorder %s55, 0
      %p312 = por %p310, %p311
      %p313 = scmp.ne.s32.totalorder %s301, %s302
      %p314 = scmp.eq.s32.totalorder %s56, 3
      %p315 = por %p313, %p314
      %p317 = scmp.ne.s32.totalorder %s302, %s316
      %p318 = scmp.eq.s32.totalorder %s56, 0
      %p319 = por %p317, %p318
      %s321 = sadd.s32 %s320, 1
      %p324 = scmp.eq.s32.totalorder %s50, 3
      %p325 = scmp.ne.s32.totalorder %s320, %s322
      %p326 = scmp.eq.s32.totalorder %s50, 0
      %p327 = por %p325, %p326
      %p328 = scmp.ne.s32.totalorder %s320, %s322
      %p329 = scmp.eq.s32.totalorder %s55, 3
      %p330 = por %p328, %p329
      %p331 = scmp.ne.s32.totalorder %s322, %s323
      %p332 = scmp.eq.s32.totalorder %s55, 0
      %p333 = por %p331, %p332
      %p334 = scmp.ne.s32.totalorder %s322, %s323
      %p335 = scmp.eq.s32.totalorder %s56, 3
      %p336 = por %p334, %p335
      %p338 = scmp.ne.s32.totalorder %s323, %s337
      %p339 = scmp.eq.s32.totalorder %s56, 0
      %p340 = por %p338, %p339
      %s342 = sadd.s32 %s341, 1
      %p345 = scmp.eq.s32.totalorder %s50, 3
      %p346 = scmp.ne.s32.totalorder %s341, %s343
      %p347 = scmp.eq.s32.totalorder %s50, 0
      %p348 = por %p346, %p347
      %p349 = scmp.ne.s32.totalorder %s341, %s343
      %p350 = scmp.eq.s32.totalorder %s55, 3
      %p351 = por %p349, %p350
      %p352 = scmp.ne.s32.totalorder %s343, %s344
      %p353 = scmp.eq.s32.totalorder %s55, 0
      %p354 = por %p352, %p353
      %p355 = scmp.ne.s32.totalorder %s343, %s344
      %p356 = scmp.eq.s32.totalorder %s56, 3
      %p357 = por %p355, %p356
      %p359 = scmp.ne.s32.totalorder %s344, %s358
      %p360 = scmp.eq.s32.totalorder %s56, 0
      %p361 = por %p359, %p360
      %s363 = sadd.s32 %s362, 1
      %p366 = scmp.eq.s32.totalorder %s50, 3
      %p367 = scmp.ne.s32.totalorder %s362, %s364
      %p368 = scmp.eq.s32.totalorder %s50, 0
      %p369 = por %p367, %p368
      %p370 = scmp.ne.s32.totalorder %s362, %s364
      %p371 = scmp.eq.s32.totalorder %s55, 3
      %p372 = por %p370, %p371
      %p373 = scmp.ne.s32.totalorder %s364, %s365
      %p374 = scmp.eq.s32.totalorder %s55, 0
      %p375 = por %p373, %p374
      %p376 = scmp.ne.s32.totalorder %s364, %s365
      %p377 = scmp.eq.s32.totalorder %s56, 3
      %p378 = por %p376, %p377
      %p380 = scmp.ne.s32.totalorder %s365, %s379
      %p381 = scmp.eq.s32.totalorder %s56, 0
      %p382 = por %p380, %p381
      %s384 = sadd.s32 %s383, 1
      %p387 = scmp.eq.s32.totalorder %s50, 3
      %p388 = scmp.ne.s32.totalorder %s383, %s385
      %p389 = scmp.eq.s32.totalorder %s50, 0
      %p390 = por %p388, %p389
      %p391 = scmp.ne.s32.totalorder %s383, %s385
      %p392 = scmp.eq.s32.totalorder %s55, 3
      %p393 = por %p391, %p392
      %p394 = scmp.ne.s32.totalorder %s385, %s386
      %p395 = scmp.eq.s32.totalorder %s55, 0
      %p396 = por %p394, %p395
      %p397 = scmp.ne.s32.totalorder %s385, %s386
      %p398 = scmp.eq.s32.totalorder %s56, 3
      %p399 = por %p397, %p398
      %p401 = scmp.ne.s32.totalorder %s386, %s400
      %p402 = scmp.eq.s32.totalorder %s56, 0
      %p403 = por %p401, %p402
      %s405 = sadd.s32 %s404, 1
      %p408 = scmp.eq.s32.totalorder %s50, 3
      %p409 = scmp.ne.s32.totalorder %s404, %s406
      %p410 = scmp.eq.s32.totalorder %s50, 0
      %p411 = por %p409, %p410
      %p412 = scmp.ne.s32.totalorder %s404, %s406
      %p413 = scmp.eq.s32.totalorder %s55, 3
      %p414 = por %p412, %p413
      %p415 = scmp.ne.s32.totalorder %s406, %s407
      %p416 = scmp.eq.s32.totalorder %s55, 0
      %p417 = por %p415, %p416
      %p418 = scmp.ne.s32.totalorder %s406, %s407
      %p419 = scmp.eq.s32.totalorder %s56, 3
      %p420 = por %p418, %p419
      %p422 = scmp.ne.s32.totalorder %s407, %s421
      %p423 = scmp.eq.s32.totalorder %s56, 0
      %p424 = por %p422, %p423
      %s426 = sadd.s32 %s425, 1
      %p429 = scmp.eq.s32.totalorder %s50, 3
      %p430 = scmp.ne.s32.totalorder %s425, %s427
      %p431 = scmp.eq.s32.totalorder %s50, 0
      %p432 = por %p430, %p431
      %p433 = scmp.ne.s32.totalorder %s425, %s427
      %p434 = scmp.eq.s32.totalorder %s55, 3
      %p435 = por %p433, %p434
      %p436 = scmp.ne.s32.totalorder %s427, %s428
      %p437 = scmp.eq.s32.totalorder %s55, 0
      %p438 = por %p436, %p437
      %p439 = scmp.ne.s32.totalorder %s427, %s428
      %p440 = scmp.eq.s32.totalorder %s56, 3
      %p441 = por %p439, %p440
      %p443 = scmp.ne.s32.totalorder %s428, %s442
      %p444 = scmp.eq.s32.totalorder %s56, 0
      %p445 = por %p443, %p444
      %s447 = sadd.s32 %s446, 1
      %p450 = scmp.eq.s32.totalorder %s50, 3
      %p451 = scmp.ne.s32.totalorder %s446, %s448
      %p452 = scmp.eq.s32.totalorder %s50, 0
      %p453 = por %p451, %p452
      %p454 = scmp.ne.s32.totalorder %s446, %s448
      %p455 = scmp.eq.s32.totalorder %s55, 3
      %p456 = por %p454, %p455
      %p457 = scmp.ne.s32.totalorder %s448, %s449
      %p458 = scmp.eq.s32.totalorder %s55, 0
      %p459 = por %p457, %p458
      %p460 = scmp.ne.s32.totalorder %s448, %s449
      %p461 = scmp.eq.s32.totalorder %s56, 3
      %p462 = por %p460, %p461
      %p464 = scmp.ne.s32.totalorder %s449, %s463
      %p465 = scmp.eq.s32.totalorder %s56, 0
      %p466 = por %p464, %p465
      %s468 = sadd.s32 %s467, 1
      %p471 = scmp.eq.s32.totalorder %s50, 3
      %p472 = scmp.ne.s32.totalorder %s467, %s469
      %p473 = scmp.eq.s32.totalorder %s50, 0
      %p474 = por %p472, %p473
      %p475 = scmp.ne.s32.totalorder %s467, %s469
      %p476 = scmp.eq.s32.totalorder %s55, 3
      %p477 = por %p475, %p476
      %p478 = scmp.ne.s32.totalorder %s469, %s470
      %p479 = scmp.eq.s32.totalorder %s55, 0
      %p480 = por %p478, %p479
      %p481 = scmp.ne.s32.totalorder %s469, %s470
      %p482 = scmp.eq.s32.totalorder %s56, 3
      %p483 = por %p481, %p482
      %p485 = scmp.ne.s32.totalorder %s470, %s484
      %p486 = scmp.eq.s32.totalorder %s56, 0
      %p487 = por %p485, %p486
      %s489 = sadd.s32 %s488, 1
      %p492 = scmp.eq.s32.totalorder %s50, 3
      %p493 = scmp.ne.s32.totalorder %s488, %s490
      %p494 = scmp.eq.s32.totalorder %s50, 0
      %p495 = por %p493, %p494
      %p496 = scmp.ne.s32.totalorder %s488, %s490
      %p497 = scmp.eq.s32.totalorder %s55, 3
      %p498 = por %p496, %p497
      %p499 = scmp.ne.s32.totalorder %s490, %s491
      %p500 = scmp.eq.s32.totalorder %s55, 0
      %p501 = por %p499, %p500
      %p502 = scmp.ne.s32.totalorder %s490, %s491
      %p503 = scmp.eq.s32.totalorder %s56, 3
      %p504 = por %p502, %p503
      %p506 = scmp.ne.s32.totalorder %s491, %s505
      %p507 = scmp.eq.s32.totalorder %s56, 0
      %p508 = por %p506, %p507
      %s510 = sadd.s32 %s509, 1
      %p513 = scmp.eq.s32.totalorder %s50, 3
      %p514 = scmp.ne.s32.totalorder %s509, %s511
      %p515 = scmp.eq.s32.totalorder %s50, 0
      %p516 = por %p514, %p515
      %p517 = scmp.ne.s32.totalorder %s509, %s511
      %p518 = scmp.eq.s32.totalorder %s55, 3
      %p519 = por %p517, %p518
      %p520 = scmp.ne.s32.totalorder %s511, %s512
      %p521 = scmp.eq.s32.totalorder %s55, 0
      %p522 = por %p520, %p521
      %p523 = scmp.ne.s32.totalorder %s511, %s512
      %p524 = scmp.eq.s32.totalorder %s56, 3
      %p525 = por %p523, %p524
      %p527 = scmp.ne.s32.totalorder %s512, %s526
      %p528 = scmp.eq.s32.totalorder %s56, 0
      %p529 = por %p527, %p528
      %s531 = sadd.s32 %s530, 1
      %p534 = scmp.eq.s32.totalorder %s50, 3
      %p535 = scmp.ne.s32.totalorder %s530, %s532
      %p536 = scmp.eq.s32.totalorder %s50, 0
      %p537 = por %p535, %p536
      %p538 = scmp.ne.s32.totalorder %s530, %s532
      %p539 = scmp.eq.s32.totalorder %s55, 3
      %p540 = por %p538, %p539
      %p541 = scmp.ne.s32.totalorder %s532, %s533
      %p542 = scmp.eq.s32.totalorder %s55, 0
      %p543 = por %p541, %p542
      %p544 = scmp.ne.s32.totalorder %s532, %s533
      %p545 = scmp.eq.s32.totalorder %s56, 3
      %p546 = por %p544, %p545
      %p548 = scmp.ne.s32.totalorder %s533, %s547
      %p549 = scmp.eq.s32.totalorder %s56, 0
      %p550 = por %p548, %p549
      %s552 = sadd.s32 %s551, 1
      %p555 = scmp.eq.s32.totalorder %s50, 3
      %p556 = scmp.ne.s32.totalorder %s551, %s553
      %p557 = scmp.eq.s32.totalorder %s50, 0
      %p558 = por %p556, %p557
      %p559 = scmp.ne.s32.totalorder %s551, %s553
      %p560 = scmp.eq.s32.totalorder %s55, 3
      %p561 = por %p559, %p560
      %p562 = scmp.ne.s32.totalorder %s553, %s554
      %p563 = scmp.eq.s32.totalorder %s55, 0
      %p564 = por %p562, %p563
      %p565 = scmp.ne.s32.totalorder %s553, %s554
      %p566 = scmp.eq.s32.totalorder %s56, 3
      %p567 = por %p565, %p566
      %p569 = scmp.ne.s32.totalorder %s554, %s568
      %p570 = scmp.eq.s32.totalorder %s56, 0
      %p571 = por %p569, %p570
      %s573 = sadd.s32 %s572, 1
      %p576 = scmp.eq.s32.totalorder %s50, 3
      %p577 = scmp.ne.s32.totalorder %s572, %s574
      %p578 = scmp.eq.s32.totalorder %s50, 0
      %p579 = por %p577, %p578
      %p580 = scmp.ne.s32.totalorder %s572, %s574
      %p581 = scmp.eq.s32.totalorder %s55, 3
      %p582 = por %p580, %p581
      %p583 = scmp.ne.s32.totalorder %s574, %s575
      %p584 = scmp.eq.s32.totalorder %s55, 0
      %p585 = por %p583, %p584
      %p586 = scmp.ne.s32.totalorder %s574, %s575
      %p587 = scmp.eq.s32.totalorder %s56, 3
      %p588 = por %p586, %p587
      %p590 = scmp.ne.s32.totalorder %s575, %s589
      %p591 = scmp.eq.s32.totalorder %s56, 0
      %p592 = por %p590, %p591
      %s594 = sadd.s32 %s593, 1
      %p597 = scmp.eq.s32.totalorder %s50, 3
      %p598 = scmp.ne.s32.totalorder %s593, %s595
      %p599 = scmp.eq.s32.totalorder %s50, 0
      %p600 = por %p598, %p599
      %p601 = scmp.ne.s32.totalorder %s593, %s595
      %p602 = scmp.eq.s32.totalorder %s55, 3
      %p603 = por %p601, %p602
      %p604 = scmp.ne.s32.totalorder %s595, %s596
      %p605 = scmp.eq.s32.totalorder %s55, 0
      %p606 = por %p604, %p605
      %p607 = scmp.ne.s32.totalorder %s595, %s596
      %p608 = scmp.eq.s32.totalorder %s56, 3
      %p609 = por %p607, %p608
      %p611 = scmp.ne.s32.totalorder %s596, %s610
      %p612 = scmp.eq.s32.totalorder %s56, 0
      %p613 = por %p611, %p612
      %s615 = sadd.s32 %s614, 1
      %p618 = scmp.eq.s32.totalorder %s50, 3
      %p619 = scmp.ne.s32.totalorder %s614, %s616
      %p620 = scmp.eq.s32.totalorder %s50, 0
      %p621 = por %p619, %p620
      %p622 = scmp.ne.s32.totalorder %s614, %s616
      %p623 = scmp.eq.s32.totalorder %s55, 3
      %p624 = por %p622, %p623
      %p625 = scmp.ne.s32.totalorder %s616, %s617
      %p626 = scmp.eq.s32.totalorder %s55, 0
      %p627 = por %p625, %p626
      %p628 = scmp.ne.s32.totalorder %s616, %s617
      %p629 = scmp.eq.s32.totalorder %s56, 3
      %p630 = por %p628, %p629
      %p632 = scmp.ne.s32.totalorder %s617, %s631
      %p633 = scmp.eq.s32.totalorder %s56, 0
      %p634 = por %p632, %p633
      %p635 = scmp.le.s32.totalorder 1, %s50
      %p636 = scmp.lt.s32.totalorder %s50, 5
      %p637 = pnand %p635, %p636
      %p638 = pneg %p637
      // Predicated region
      $region9: #{tpu_custom_call.1} parent=5 // pred_check
        _
      $region10: #{tpu_custom_call.1} parent=5 // pred_check_branch
        %640 = sbr.rel (%p637) target = $region12
      $region11: #{tpu_custom_call.1} parent=5 // pred_region
        %s641 = ssub.s32 %s50, 1
        // Predicated region
        $region13: #{tpu_custom_call.1} parent=11 // pred_check
          %p642 = pneg %p71
        $region14: #{tpu_custom_call.1} parent=11 // pred_check_branch
          %644 = sbr.rel (%p642) target = $region16
        $region15: #{tpu_custom_call.1} parent=11 // pred_region
          %s646 = ssub.s32 384, 384
          %647 = vsyncadd [#allocation10], %s646
          %s648 = sshll.u32 [#allocation9], 4
          %s649 = int_to_ptr.vmem [resolvable:$true] %s648
          %654 = dma.hbm_to_vmem [thread:$0]  %s2, 384, %s649, [#allocation10], 128, 128, 8
        $region16: #{tpu_custom_call.1} parent=11 // pred_fallthru
          _
        // Predicated region
        $region17: #{tpu_custom_call.1} parent=11 // pred_check
          %p655 = pneg %p144
        $region18: #{tpu_custom_call.1} parent=11 // pred_check_branch
          %657 = sbr.rel (%p655) target = $region20
        $region19: #{tpu_custom_call.1} parent=11 // pred_region
          %s659 = ssub.s32 64, 64
          %660 = vsyncadd [#allocation13], %s659
          %s662 = sshll.u32 [#allocation12], 4
          %s663 = int_to_ptr.vmem [resolvable:$true] %s662
          %665 = dma.hbm_to_vmem [thread:$0]  %s5, 64, %s663, [#allocation13]
        $region20: #{tpu_custom_call.1} parent=11 // pred_fallthru
          _
        // Predicated region
        $region21: #{tpu_custom_call.1} parent=11 // pred_check
          %p666 = pneg %p165
        $region22: #{tpu_custom_call.1} parent=11 // pred_check_branch
          %668 = sbr.rel (%p666) target = $region24
        $region23: #{tpu_custom_call.1} parent=11 // pred_region
          %s670 = ssub.s32 256, 256
          %671 = vsyncadd [#allocation13], %s670
          %s672 = sshll.u32 [#allocation14], 4
          %s673 = int_to_ptr.vmem [resolvable:$true] %s672
          %678 = dma.hbm_to_vmem [thread:$0]  %s6, 256, %s673, [#allocation13], 128, 128, 8
        $region24: #{tpu_custom_call.1} parent=11 // pred_fallthru
          _
        // Predicated region
        $region25: #{tpu_custom_call.1} parent=11 // pred_check
          %p679 = pneg %p186
        $region26: #{tpu_custom_call.1} parent=11 // pred_check_branch
          %681 = sbr.rel (%p679) target = $region28
        $region27: #{tpu_custom_call.1} parent=11 // pred_region
          _
        $region28: #{tpu_custom_call.1} parent=11 // pred_fallthru
          _
        // Predicated region
        $region29: #{tpu_custom_call.1} parent=11 // pred_check
          %p682 = pneg %p207
        $region30: #{tpu_custom_call.1} parent=11 // pred_check_branch
          %684 = sbr.rel (%p682) target = $region32
        $region31: #{tpu_custom_call.1} parent=11 // pred_region
          _
        $region32: #{tpu_custom_call.1} parent=11 // pred_fallthru
          _
        // Predicated region
        $region33: #{tpu_custom_call.1} parent=11 // pred_check
          %p685 = pneg %p228
        $region34: #{tpu_custom_call.1} parent=11 // pred_check_branch
          %687 = sbr.rel (%p685) target = $region36
        $region35: #{tpu_custom_call.1} parent=11 // pred_region
          %s689 = ssub.s32 32, 32
          %690 = vsyncadd [#allocation16], %s689
          %s692 = sshll.u32 [#allocation15], 4
          %s693 = int_to_ptr.vmem [resolvable:$true] %s692
          %695 = dma.hbm_to_vmem [thread:$0]  %s9, 32, %s693, [#allocation16]
        $region36: #{tpu_custom_call.1} parent=11 // pred_fallthru
          _
        // Predicated region
        $region37: #{tpu_custom_call.1} parent=11 // pred_check
          %p696 = pneg %p249
        $region38: #{tpu_custom_call.1} parent=11 // pred_check_branch
          %698 = sbr.rel (%p696) target = $region40
        $region39: #{tpu_custom_call.1} parent=11 // pred_region
          %s700 = ssub.s32 16, 16
          %701 = vsyncadd [#allocation16], %s700
          %s703 = sshll.u32 [#allocation17], 4
          %s704 = int_to_ptr.vmem [resolvable:$true] %s703
          %706 = dma.hbm_to_vmem [thread:$0]  %s10, 16, %s704, [#allocation16]
        $region40: #{tpu_custom_call.1} parent=11 // pred_fallthru
          _
        // Predicated region
        $region41: #{tpu_custom_call.1} parent=11 // pred_check
          %p707 = pneg %p270
        $region42: #{tpu_custom_call.1} parent=11 // pred_check_branch
          %709 = sbr.rel (%p707) target = $region44
        $region43: #{tpu_custom_call.1} parent=11 // pred_region
          %s711 = ssub.s32 16, 16
          %712 = vsyncadd [#allocation19], %s711
          %s714 = sshll.u32 [#allocation18], 4
          %s715 = int_to_ptr.vmem [resolvable:$true] %s714
          %717 = dma.hbm_to_vmem [thread:$0]  %s11, 16, %s715, [#allocation19]
        $region44: #{tpu_custom_call.1} parent=11 // pred_fallthru
          _
        // Predicated region
        $region45: #{tpu_custom_call.1} parent=11 // pred_check
          %p718 = pneg %p291
        $region46: #{tpu_custom_call.1} parent=11 // pred_check_branch
          %720 = sbr.rel (%p718) target = $region48
        $region47: #{tpu_custom_call.1} parent=11 // pred_region
          %s722 = ssub.s32 16, 16
          %723 = vsyncadd [#allocation19], %s722
          %s725 = sshll.u32 [#allocation20], 4
          %s726 = int_to_ptr.vmem [resolvable:$true] %s725
          %728 = dma.hbm_to_vmem [thread:$0]  %s12, 16, %s726, [#allocation19]
        $region48: #{tpu_custom_call.1} parent=11 // pred_fallthru
          _
        // Predicated region
        $region49: #{tpu_custom_call.1} parent=11 // pred_check
          %p729 = pneg %p312
        $region50: #{tpu_custom_call.1} parent=11 // pred_check_branch
          %731 = sbr.rel (%p729) target = $region52
        $region51: #{tpu_custom_call.1} parent=11 // pred_region
          %s733 = ssub.s32 16, 16
          %734 = vsyncadd [#allocation22], %s733
          %s736 = sshll.u32 [#allocation21], 4
          %s737 = int_to_ptr.vmem [resolvable:$true] %s736
          %739 = dma.hbm_to_vmem [thread:$0]  %s13, 16, %s737, [#allocation22]
        $region52: #{tpu_custom_call.1} parent=11 // pred_fallthru
          _
        // Predicated region
        $region53: #{tpu_custom_call.1} parent=11 // pred_check
          %p740 = pneg %p333
        $region54: #{tpu_custom_call.1} parent=11 // pred_check_branch
          %742 = sbr.rel (%p740) target = $region56
        $region55: #{tpu_custom_call.1} parent=11 // pred_region
          _
        $region56: #{tpu_custom_call.1} parent=11 // pred_fallthru
          _
        // Predicated region
        $region57: #{tpu_custom_call.1} parent=11 // pred_check
          %p743 = pneg %p354
        $region58: #{tpu_custom_call.1} parent=11 // pred_check_branch
          %745 = sbr.rel (%p743) target = $region60
        $region59: #{tpu_custom_call.1} parent=11 // pred_region
          %s747 = ssub.s32 16, 16
          %748 = vsyncadd [#allocation22], %s747
          %s750 = sshll.u32 [#allocation23], 4
          %s751 = int_to_ptr.vmem [resolvable:$true] %s750
          %753 = dma.hbm_to_vmem [thread:$0]  %s15, 16, %s751, [#allocation22]
        $region60: #{tpu_custom_call.1} parent=11 // pred_fallthru
          _
        // Predicated region
        $region61: #{tpu_custom_call.1} parent=11 // pred_check
          %p754 = pneg %p375
        $region62: #{tpu_custom_call.1} parent=11 // pred_check_branch
          %756 = sbr.rel (%p754) target = $region64
        $region63: #{tpu_custom_call.1} parent=11 // pred_region
          %s758 = ssub.s32 1024, 1024
          %759 = vsyncadd [#allocation25], %s758
          %s760 = sshll.u32 [#allocation24], 4
          %s761 = int_to_ptr.vmem [resolvable:$true] %s760
          %766 = dma.hbm_to_vmem [thread:$0]  %s16, 1024, %s761, [#allocation25], 64, 64, 4
        $region64: #{tpu_custom_call.1} parent=11 // pred_fallthru
          _
        // Predicated region
        $region65: #{tpu_custom_call.1} parent=11 // pred_check
          %p767 = pneg %p396
        $region66: #{tpu_custom_call.1} parent=11 // pred_check_branch
          %769 = sbr.rel (%p767) target = $region68
        $region67: #{tpu_custom_call.1} parent=11 // pred_region
          _
        $region68: #{tpu_custom_call.1} parent=11 // pred_fallthru
          _
        // Predicated region
        $region69: #{tpu_custom_call.1} parent=11 // pred_check
          %p770 = pneg %p417
        $region70: #{tpu_custom_call.1} parent=11 // pred_check_branch
          %772 = sbr.rel (%p770) target = $region72
        $region71: #{tpu_custom_call.1} parent=11 // pred_region
          %s774 = ssub.s32 1024, 1024
          %775 = vsyncadd [#allocation25], %s774
          %s776 = sshll.u32 [#allocation26], 4
          %s777 = int_to_ptr.vmem [resolvable:$true] %s776
          %782 = dma.hbm_to_vmem [thread:$0]  %s18, 1024, %s777, [#allocation25], 64, 64, 4
        $region72: #{tpu_custom_call.1} parent=11 // pred_fallthru
          _
        // Predicated region
        $region73: #{tpu_custom_call.1} parent=11 // pred_check
          %p783 = pneg %p438
        $region74: #{tpu_custom_call.1} parent=11 // pred_check_branch
          %785 = sbr.rel (%p783) target = $region76
        $region75: #{tpu_custom_call.1} parent=11 // pred_region
          _
        $region76: #{tpu_custom_call.1} parent=11 // pred_fallthru
          _
        // Predicated region
        $region77: #{tpu_custom_call.1} parent=11 // pred_check
          %p786 = pneg %p459
        $region78: #{tpu_custom_call.1} parent=11 // pred_check_branch
          %788 = sbr.rel (%p786) target = $region80
        $region79: #{tpu_custom_call.1} parent=11 // pred_region
          _
        $region80: #{tpu_custom_call.1} parent=11 // pred_fallthru
          _
        // Predicated region
        $region81: #{tpu_custom_call.1} parent=11 // pred_check
          %p789 = pneg %p480
        $region82: #{tpu_custom_call.1} parent=11 // pred_check_branch
          %791 = sbr.rel (%p789) target = $region84
        $region83: #{tpu_custom_call.1} parent=11 // pred_region
          _
        $region84: #{tpu_custom_call.1} parent=11 // pred_fallthru
          _
        // Predicated region
        $region85: #{tpu_custom_call.1} parent=11 // pred_check
          %p792 = pneg %p501
        $region86: #{tpu_custom_call.1} parent=11 // pred_check_branch
          %794 = sbr.rel (%p792) target = $region88
        $region87: #{tpu_custom_call.1} parent=11 // pred_region
          %s796 = ssub.s32 1024, 1024
          %797 = vsyncadd [#allocation28], %s796
          %s798 = sshll.u32 [#allocation27], 4
          %s799 = int_to_ptr.vmem [resolvable:$true] %s798
          %804 = dma.hbm_to_vmem [thread:$0]  %s22, 1024, %s799, [#allocation28], 64, 64, 4
        $region88: #{tpu_custom_call.1} parent=11 // pred_fallthru
          _
        // Predicated region
        $region89: #{tpu_custom_call.1} parent=11 // pred_check
          %p805 = pneg %p522
        $region90: #{tpu_custom_call.1} parent=11 // pred_check_branch
          %807 = sbr.rel (%p805) target = $region92
        $region91: #{tpu_custom_call.1} parent=11 // pred_region
          _
        $region92: #{tpu_custom_call.1} parent=11 // pred_fallthru
          _
        // Predicated region
        $region93: #{tpu_custom_call.1} parent=11 // pred_check
          %p808 = pneg %p543
        $region94: #{tpu_custom_call.1} parent=11 // pred_check_branch
          %810 = sbr.rel (%p808) target = $region96
        $region95: #{tpu_custom_call.1} parent=11 // pred_region
          _
        $region96: #{tpu_custom_call.1} parent=11 // pred_fallthru
          _
        // Predicated region
        $region97: #{tpu_custom_call.1} parent=11 // pred_check
          %p811 = pneg %p564
        $region98: #{tpu_custom_call.1} parent=11 // pred_check_branch
          %813 = sbr.rel (%p811) target = $region100
        $region99: #{tpu_custom_call.1} parent=11 // pred_region
          _
        $region100: #{tpu_custom_call.1} parent=11 // pred_fallthru
          _
        // Predicated region
        $region101: #{tpu_custom_call.1} parent=11 // pred_check
          %p814 = pneg %p585
        $region102: #{tpu_custom_call.1} parent=11 // pred_check_branch
          %816 = sbr.rel (%p814) target = $region104
        $region103: #{tpu_custom_call.1} parent=11 // pred_region
          _
        $region104: #{tpu_custom_call.1} parent=11 // pred_fallthru
          _
        // Predicated region
        $region105: #{tpu_custom_call.1} parent=11 // pred_check
          %p817 = pneg %p606
        $region106: #{tpu_custom_call.1} parent=11 // pred_check_branch
          %819 = sbr.rel (%p817) target = $region108
        $region107: #{tpu_custom_call.1} parent=11 // pred_region
          _
        $region108: #{tpu_custom_call.1} parent=11 // pred_fallthru
          _
      $region12: #{tpu_custom_call.1} parent=5 // pred_fallthru
        _
      %p820 = scmp.lt.s32.totalorder %s50, 4
      // Predicated region
      $region109: #{tpu_custom_call.1} parent=5 // pred_check
        %p821 = pneg %p820
      $region110: #{tpu_custom_call.1} parent=5 // pred_check_branch
        %823 = sbr.rel (%p821) target = $region112
      $region111: #{tpu_custom_call.1} parent=5 // pred_region
        // Predicated region
        $region113: #{tpu_custom_call.1} parent=111 // pred_check
          %p824 = pneg %p91
        $region114: #{tpu_custom_call.1} parent=111 // pred_check_branch
          %826 = sbr.rel (%p824) target = $region116
        $region115: #{tpu_custom_call.1} parent=111 // pred_region
          %s827 = smul.u32 2, %s50
          %p828 = scmp.lt.s32.totalorder %s827, 7
          %s829 = scalar_select %p828, %s827, 7
          %s830 = smul.addr %s829, 8
          %s831 = scalar_lea.vmem %s3, %s830
          %s832 = smul.u32 2, %s50
        $region116: #{tpu_custom_call.1} parent=111 // pred_fallthru
          _
        // Predicated region
        $region117: #{tpu_custom_call.1} parent=111 // pred_check
          %p833 = pneg %p117
        $region118: #{tpu_custom_call.1} parent=111 // pred_check_branch
          %835 = sbr.rel (%p833) target = $region120
        $region119: #{tpu_custom_call.1} parent=111 // pred_region
          %s836 = smul.u32 2, %s50
          %p837 = scmp.lt.s32.totalorder %s836, 7
          %s838 = scalar_select %p837, %s836, 7
          %s839 = smul.addr %s838, 8
          %s840 = scalar_lea.vmem %s4, %s839
          %s841 = smul.u32 2, %s50
        $region120: #{tpu_custom_call.1} parent=111 // pred_fallthru
          _
      $region112: #{tpu_custom_call.1} parent=5 // pred_fallthru
        _
      %p842 = scmp.le.s32.totalorder 1, %s50
      %p843 = scmp.lt.s32.totalorder %s50, 5
      %p844 = pnand %p842, %p843
      %p845 = pneg %p844
      // Predicated region
      $region121: #{tpu_custom_call.1} parent=5 // pred_check
        _
      $region122: #{tpu_custom_call.1} parent=5 // pred_check_branch
        %847 = sbr.rel (%p844) target = $region124
      $region123: #{tpu_custom_call.1} parent=5 // pred_region
        %s848 = ssub.s32 %s50, 1
        // Predicated region
        $region125: #{tpu_custom_call.1} parent=123 // pred_check
          %p849 = pneg %p71
        $region126: #{tpu_custom_call.1} parent=123 // pred_check_branch
          %851 = sbr.rel (%p849) target = $region128
        $region127: #{tpu_custom_call.1} parent=123 // pred_region
          %852 = dma.done [#allocation10], 384
        $region128: #{tpu_custom_call.1} parent=123 // pred_fallthru
          _
        // Predicated region
        $region129: #{tpu_custom_call.1} parent=123 // pred_check
          %p853 = pneg %p144
        $region130: #{tpu_custom_call.1} parent=123 // pred_check_branch
          %855 = sbr.rel (%p853) target = $region132
        $region131: #{tpu_custom_call.1} parent=123 // pred_region
          %856 = dma.done [#allocation13], 64
        $region132: #{tpu_custom_call.1} parent=123 // pred_fallthru
          _
        // Predicated region
        $region133: #{tpu_custom_call.1} parent=123 // pred_check
          %p857 = pneg %p165
        $region134: #{tpu_custom_call.1} parent=123 // pred_check_branch
          %859 = sbr.rel (%p857) target = $region136
        $region135: #{tpu_custom_call.1} parent=123 // pred_region
          %860 = dma.done [#allocation13], 256
        $region136: #{tpu_custom_call.1} parent=123 // pred_fallthru
          _
        // Predicated region
        $region137: #{tpu_custom_call.1} parent=123 // pred_check
          %p861 = pneg %p228
        $region138: #{tpu_custom_call.1} parent=123 // pred_check_branch
          %863 = sbr.rel (%p861) target = $region140
        $region139: #{tpu_custom_call.1} parent=123 // pred_region
          %864 = dma.done [#allocation16], 32
        $region140: #{tpu_custom_call.1} parent=123 // pred_fallthru
          _
        // Predicated region
        $region141: #{tpu_custom_call.1} parent=123 // pred_check
          %p865 = pneg %p249
        $region142: #{tpu_custom_call.1} parent=123 // pred_check_branch
          %867 = sbr.rel (%p865) target = $region144
        $region143: #{tpu_custom_call.1} parent=123 // pred_region
          %868 = dma.done [#allocation16], 16
        $region144: #{tpu_custom_call.1} parent=123 // pred_fallthru
          _
        // Predicated region
        $region145: #{tpu_custom_call.1} parent=123 // pred_check
          %p869 = pneg %p270
        $region146: #{tpu_custom_call.1} parent=123 // pred_check_branch
          %871 = sbr.rel (%p869) target = $region148
        $region147: #{tpu_custom_call.1} parent=123 // pred_region
          %872 = dma.done [#allocation19], 16
        $region148: #{tpu_custom_call.1} parent=123 // pred_fallthru
          _
        // Predicated region
        $region149: #{tpu_custom_call.1} parent=123 // pred_check
          %p873 = pneg %p291
        $region150: #{tpu_custom_call.1} parent=123 // pred_check_branch
          %875 = sbr.rel (%p873) target = $region152
        $region151: #{tpu_custom_call.1} parent=123 // pred_region
          %876 = dma.done [#allocation19], 16
        $region152: #{tpu_custom_call.1} parent=123 // pred_fallthru
          _
        // Predicated region
        $region153: #{tpu_custom_call.1} parent=123 // pred_check
          %p877 = pneg %p312
        $region154: #{tpu_custom_call.1} parent=123 // pred_check_branch
          %879 = sbr.rel (%p877) target = $region156
        $region155: #{tpu_custom_call.1} parent=123 // pred_region
          %880 = dma.done [#allocation22], 16
        $region156: #{tpu_custom_call.1} parent=123 // pred_fallthru
          _
        // Predicated region
        $region157: #{tpu_custom_call.1} parent=123 // pred_check
          %p881 = pneg %p354
        $region158: #{tpu_custom_call.1} parent=123 // pred_check_branch
          %883 = sbr.rel (%p881) target = $region160
        $region159: #{tpu_custom_call.1} parent=123 // pred_region
          %884 = dma.done [#allocation22], 16
        $region160: #{tpu_custom_call.1} parent=123 // pred_fallthru
          _
        // Predicated region
        $region161: #{tpu_custom_call.1} parent=123 // pred_check
          %p885 = pneg %p375
        $region162: #{tpu_custom_call.1} parent=123 // pred_check_branch
          %887 = sbr.rel (%p885) target = $region164
        $region163: #{tpu_custom_call.1} parent=123 // pred_region
          %888 = dma.done [#allocation25], 1024
        $region164: #{tpu_custom_call.1} parent=123 // pred_fallthru
          _
        // Predicated region
        $region165: #{tpu_custom_call.1} parent=123 // pred_check
          %p889 = pneg %p417
        $region166: #{tpu_custom_call.1} parent=123 // pred_check_branch
          %891 = sbr.rel (%p889) target = $region168
        $region167: #{tpu_custom_call.1} parent=123 // pred_region
          %892 = dma.done [#allocation25], 1024
        $region168: #{tpu_custom_call.1} parent=123 // pred_fallthru
          _
        // Predicated region
        $region169: #{tpu_custom_call.1} parent=123 // pred_check
          %p893 = pneg %p501
        $region170: #{tpu_custom_call.1} parent=123 // pred_check_branch
          %895 = sbr.rel (%p893) target = $region172
        $region171: #{tpu_custom_call.1} parent=123 // pred_region
          %896 = dma.done [#allocation28], 1024
        $region172: #{tpu_custom_call.1} parent=123 // pred_fallthru
          _
        %p897 = pneg %p71
        %p898 = pneg %p68
        %s899 = smul.u32 2, %s55
        %p900 = scmp.lt.s32.totalorder %s899, 7
        %s901 = scalar_select %p900, %s899, 7
        %s902 = smul.addr %s901, 8
        %s903 = scalar_lea.vmem %s3, %s902
        %p904 = pneg %p97
        %p905 = pneg %p94
        %s906 = smul.u32 2, %s55
        %p907 = scmp.lt.s32.totalorder %s906, 7
        %s908 = scalar_select %p907, %s906, 7
        %s909 = smul.addr %s908, 8
        %s910 = scalar_lea.vmem %s4, %s909
        %p911 = pneg %p123
        %p912 = pneg %p120
        %p913 = pneg %p144
        %p914 = pneg %p141
        %p915 = pneg %p165
        %p916 = pneg %p162
        %p917 = pneg %p186
        %p918 = pneg %p183
        %p919 = pneg %p207
        %p920 = pneg %p204
        %p921 = pneg %p228
        %p922 = pneg %p225
        %p923 = pneg %p249
        %p924 = pneg %p246
        %p925 = pneg %p270
        %p926 = pneg %p267
        %p927 = pneg %p291
        %p928 = pneg %p288
        %p929 = pneg %p312
        %p930 = pneg %p309
        %p931 = pneg %p333
        %p932 = pneg %p330
        %p933 = pneg %p354
        %p934 = pneg %p351
        %p935 = pneg %p375
        %p936 = pneg %p372
        %p937 = pneg %p396
        %p938 = pneg %p393
        %p939 = pneg %p417
        %p940 = pneg %p414
        %p941 = pneg %p438
        %p942 = pneg %p435
        %p943 = pneg %p459
        %p944 = pneg %p456
        %p945 = pneg %p480
        %p946 = pneg %p477
        %p947 = pneg %p501
        %p948 = pneg %p498
        %p949 = pneg %p522
        %p950 = pneg %p519
        %p951 = pneg %p543
        %p952 = pneg %p540
        %p953 = pneg %p564
        %p954 = pneg %p561
        %p955 = pneg %p585
        %p956 = pneg %p582
        %p957 = pneg %p606
        %p958 = pneg %p603
        %p959 = pneg %p627
        %p960 = pneg %p624
        %s961 = smul.u32 2, %s55
        %p962 = scmp.lt.s32.totalorder %s961, 7
        %s963 = scalar_select %p962, %s961, 7
        %s964 = smul.addr %s963, 8
        %s965 = scalar_lea.vmem %s3, %s964
        %s966 = smul.u32 2, %s55
        %s967 = smul.u32 2, %s55
        %p968 = scmp.lt.s32.totalorder %s967, 7
        %s969 = scalar_select %p968, %s967, 7
        %s970 = smul.addr %s969, 8
        %s971 = scalar_lea.vmem %s4, %s970
        %s972 = smul.u32 2, %s55
        %s974 = smul.u32 %s55, 16
        %p975 = scmp.eq.s32.totalorder %s55, 0
        // Predicated region
        $region173: #{tpu_custom_call.1} parent=123 // pred_check
          %p976 = pneg %p975
        $region174: #{tpu_custom_call.1} parent=123 // pred_check_branch
          %978 = sbr.rel (%p976) target = $region176
        $region175: #{tpu_custom_call.1} parent=123 // pred_region
          %979 = vst [vmem:[#allocation29] sm:$0xff] 0.0
          %980 = vst [vmem:[#allocation29 + $0x8] sm:$0xff] 0.0
          %981 = vst [vmem:[#allocation29 + $0x10] sm:$0xff] 0.0
          %982 = vst [vmem:[#allocation29 + $0x18] sm:$0xff] 0.0
          %983 = vst [vmem:[#allocation29 + $0x20] sm:$0xff] 0.0
          %984 = vst [vmem:[#allocation29 + $0x28] sm:$0xff] 0.0
        $region176: #{tpu_custom_call.1} parent=123 // pred_fallthru
          _
        loop: start=0, step=1, limit=16
        $region177: #{tpu_custom_call.1} parent=123 // loop_pre_header
          _
        $region178: #{tpu_custom_call.1} parent=123 // loop_header
          %s986 = sphi 0, %s990
          %p987 = scmp.ge.s32.totalorder %s986, 16
        $region179: #{tpu_custom_call.1} parent=123 // loop_header_branch
          %989 = sbr.rel (%p987) target = $region183
        $region180: #{tpu_custom_call.1} parent=123 // loop_body
          %s991 = sadd.s32 %s974, %s986
          %s992 = sld [smem:[#allocation7 + %s991]]
          %s993 = sld [smem:[#allocation6 + %s991]]
          %s994 = scalar_lea.vmem [#allocation9], %s992
          %v995 = vld [vmem:[%s994] sm:$0x1]
          %s996 = scalar_lea.vmem [#allocation2], %s986
          %997 = vst [vmem:[%s996] sm:$0x1] %v995
          %s998 = scalar_lea.vmem [#allocation9], %s993
          %v999 = vld [vmem:[%s998] sm:$0x1]
          %s1000 = scalar_lea.vmem [#allocation3], %s986
          %1001 = vst [vmem:[%s1000] sm:$0x1] %v999
        $region181: #{tpu_custom_call.1} parent=123 // loop_footer
          %s990 = sadd.s32 1, %s986
        $region182: #{tpu_custom_call.1} parent=123 // loop_footer_branch
          %985 = sbr.rel target = $region178
        $region183: #{tpu_custom_call.1} parent=123 // loop_exit
          _
        %v1002 = vld [vmem:[#allocation2] sm:$0xff]
        %v1003 = vld [vmem:[#allocation2 + $0x8] sm:$0xff]
        %v1004 = vpack.c.bf16 %v1003, %v1002
        %v1005 = vld [vmem:[#allocation3] sm:$0xff]
        %v1006 = vld [vmem:[#allocation3 + $0x8] sm:$0xff]
        %v1007 = vpack.c.bf16 %v1006, %v1005
        %v1008 = vld [vmem:[%s965] sm:$0xff]
        %v1009 = vld [vmem:[%s965 + $0x8] sm:$0xff]
        %v1010 = vld [vmem:[%s971] sm:$0xff]
        %v1011 = vld [vmem:[%s971 + $0x8] sm:$0xff]
        %v1012 = vpack.c.bf16 %v1011, %v1010
        %v1013 = vld [vmem:[#allocation12] sm:$0xf]
        %v1014 = vpack.c.bf16 %v1009, %v1008
        %v1015 = vld [vmem:[#allocation14] sm:$0xff]
        %v1016 = vld [vmem:[#allocation14 + $0x8] sm:$0xff]
        %v1019 = vunpack.c.l.b16 %v1015
        %v1020 = vunpack.c.h.b16 %v1015
        %v1021 = vunpack.c.l.b16 %v1016
        %v1022 = vunpack.c.h.b16 %v1016
        %v1023 = vpack.c.b16 %v1021, %v1019
        %v1024 = vpack.c.b16 %v1022, %v1020
        %vm1027 = vcmask 130048
        %v1029 = vsel %vm1027, %v1014, 0
        %1031 = vmatprep.subr.bf16.mxu0 %v1024
        %1032 = vmatpush1.bf16.msra.mxu0 %v1023
        %1033 = vmatprep.subr.bf16.mxu0 0
        %1034 = vmatpush1.bf16.msra.mxu0 0
        %1035 = vmatprep.subr.bf16.mxu0 0
        %1036 = vmatpush1.bf16.msra.mxu0 0
        %1037 = vmatprep.subr.bf16.mxu0 0
        %1038 = vmatpush1.bf16.msra.mxu0 0
        %1039 = vmatprep.subr.bf16.mxu0 0
        %1040 = vmatpush1.bf16.msra.mxu0 0
        %1041 = vmatprep.subr.bf16.mxu0 0
        %1042 = vmatpush1.bf16.msra.mxu0 0
        %1043 = vmatprep.subr.bf16.mxu0 0
        %1044 = vmatpush1.bf16.msra.mxu0 0
        %1045 = vmatprep.subr.bf16.mxu0 0
        %1046 = vmatpush1.bf16.msra.mxu0 0
        %1047 = vmatprep.subr.bf16.mxu0 0
        %1048 = vmatpush1.bf16.msra.mxu0 0
        %1049 = vmatprep.subr.bf16.mxu0 0
        %1050 = vmatpush1.bf16.msra.mxu0 0
        %1051 = vmatprep.subr.bf16.mxu0 0
        %1052 = vmatpush1.bf16.msra.mxu0 0
        %1053 = vmatprep.subr.bf16.mxu0 0
        %1054 = vmatpush1.bf16.msra.mxu0 0
        %1055 = vmatprep.subr.bf16.mxu0 0
        %1056 = vmatpush1.bf16.msra.mxu0 0
        %1057 = vmatprep.subr.bf16.mxu0 0
        %1058 = vmatpush1.bf16.msra.mxu0 0
        %1059 = vmatprep.subr.bf16.mxu0 0
        %1060 = vmatpush1.bf16.msra.mxu0 0
        %1061 = vmatprep.subr.bf16.mxu0 0
        %1062 = vmatpush1.bf16.msra.mxu0 0
        %1063 = vmatprep.mubr.bf16.mxu0 0
        %1064 = vmatmul.mubr.bf16.gmra.mrb[0].mxu0 %v1029
        %v1065 = vpop.f32.mrb[0].mxu0
        %v1066 = vadd.f32 0.0, %v1065
        %v1067 = vpop.f32.mrb[0].mxu0
        %v1068 = vadd.f32 0.0, %v1067
        %v1069 = vpop.f32.mrb[0].mxu0
        %v1070 = vadd.f32 0.0, %v1069
        %v1071 = vpop.f32.mrb[0].mxu0
        %v1072 = vadd.f32 0.0, %v1071
        %1073 = vdwg.mxu0
        %v1076 = vunpack.c.l.s4 1983009808
        %v1077 = vunpack.c.0.s8 %v1076
        %v1078 = vlaneseq
        %v1079 = vshrl.u32 %v1078, 7
        %v1080 = vsub.s32 %v1077, %v1079
        %v1081 = vrot.slane %v1013, %v1080
        %v1082 = vcombine.high %v1081, %v1081
        %vm1083 = vcmask 31744
        %v1085 = vsel %vm1083, %v1012, 0
        %vm1087 = vcmask 1041408
        %v1089 = vsel %vm1087, %v1081, 0
        %v1092 = vsel %vm1087, %v1082, 0
        %1094 = vmatprep.subr.bf16.mxu0 %v1092
        %1095 = vmatpush1.bf16.msra.mxu0 %v1089
        %1096 = vmatprep.subr.bf16.mxu0 0
        %1097 = vmatpush1.bf16.msra.mxu0 0
        %1098 = vmatprep.subr.bf16.mxu0 0
        %1099 = vmatpush1.bf16.msra.mxu0 0
        %1100 = vmatprep.subr.bf16.mxu0 0
        %1101 = vmatpush1.bf16.msra.mxu0 0
        %1102 = vmatprep.subr.bf16.mxu0 0
        %1103 = vmatpush1.bf16.msra.mxu0 0
        %1104 = vmatprep.subr.bf16.mxu0 0
        %1105 = vmatpush1.bf16.msra.mxu0 0
        %1106 = vmatprep.subr.bf16.mxu0 0
        %1107 = vmatpush1.bf16.msra.mxu0 0
        %1108 = vmatprep.subr.bf16.mxu0 0
        %1109 = vmatpush1.bf16.msra.mxu0 0
        %1110 = vmatprep.subr.bf16.mxu0 0
        %1111 = vmatpush1.bf16.msra.mxu0 0
        %1112 = vmatprep.subr.bf16.mxu0 0
        %1113 = vmatpush1.bf16.msra.mxu0 0
        %1114 = vmatprep.subr.bf16.mxu0 0
        %1115 = vmatpush1.bf16.msra.mxu0 0
        %1116 = vmatprep.subr.bf16.mxu0 0
        %1117 = vmatpush1.bf16.msra.mxu0 0
        %1118 = vmatprep.subr.bf16.mxu0 0
        %1119 = vmatpush1.bf16.msra.mxu0 0
        %1120 = vmatprep.subr.bf16.mxu0 0
        %1121 = vmatpush1.bf16.msra.mxu0 0
        %1122 = vmatprep.subr.bf16.mxu0 0
        %1123 = vmatpush1.bf16.msra.mxu0 0
        %1124 = vmatprep.subr.bf16.mxu0 0
        %1125 = vmatpush1.bf16.msra.mxu0 0
        %1126 = vmatprep.mubr.bf16.mxu0 0
        %1127 = vmatmul.mubr.bf16.gmra.mrb[0].mxu0 %v1085
        %v1128 = vpop.f32.mrb[0].mxu0
        %v1129 = vadd.f32 %v1066, %v1128
        %v1130 = vpop.f32.mrb[0].mxu0
        %v1131 = vadd.f32 %v1068, %v1130
        %v1132 = vpop.f32.mrb[0].mxu0
        %v1133 = vadd.f32 %v1070, %v1132
        %v1134 = vpop.f32.mrb[0].mxu0
        %v1135 = vadd.f32 %v1072, %v1134
        %1136 = vdwg.mxu0
        %v1137 = vld [vmem:[%s7] sm:$0xff]
        %v1138 = vld [vmem:[%s7 + $0x8] sm:$0xff]
        %v1139 = vld [vmem:[%s7 + $0x10] sm:$0xff]
        %v1140 = vld [vmem:[%s7 + $0x18] sm:$0xff]
        %v1141 = vld [vmem:[%s7 + $0x20] sm:$0xff]
        %v1142 = vld [vmem:[%s7 + $0x28] sm:$0xff]
        %v1143 = vld [vmem:[%s7 + $0x30] sm:$0xff]
        %v1144 = vld [vmem:[%s7 + $0x38] sm:$0xff]
        %v1145 = vld [vmem:[%s7 + $0x40] sm:$0xff]
        %v1146 = vld [vmem:[%s7 + $0x48] sm:$0xff]
        %v1147 = vld [vmem:[%s7 + $0x50] sm:$0xff]
        %v1148 = vld [vmem:[%s7 + $0x58] sm:$0xff]
        %v1149 = vld [vmem:[%s7 + $0x60] sm:$0xff]
        %v1150 = vld [vmem:[%s7 + $0x68] sm:$0xff]
        %v1151 = vld [vmem:[%s7 + $0x70] sm:$0xff]
        %v1152 = vld [vmem:[%s7 + $0x78] sm:$0xff]
        %v1169 = vunpack.c.l.b16 %v1137
        %v1170 = vunpack.c.h.b16 %v1137
        %v1171 = vunpack.c.l.b16 %v1138
        %v1172 = vunpack.c.h.b16 %v1138
        %v1173 = vunpack.c.l.b16 %v1139
        %v1174 = vunpack.c.h.b16 %v1139
        %v1175 = vunpack.c.l.b16 %v1140
        %v1176 = vunpack.c.h.b16 %v1140
        %v1177 = vunpack.c.l.b16 %v1141
        %v1178 = vunpack.c.h.b16 %v1141
        %v1179 = vunpack.c.l.b16 %v1142
        %v1180 = vunpack.c.h.b16 %v1142
        %v1181 = vunpack.c.l.b16 %v1143
        %v1182 = vunpack.c.h.b16 %v1143
        %v1183 = vunpack.c.l.b16 %v1144
        %v1184 = vunpack.c.h.b16 %v1144
        %v1185 = vunpack.c.l.b16 %v1145
        %v1186 = vunpack.c.h.b16 %v1145
        %v1187 = vunpack.c.l.b16 %v1146
        %v1188 = vunpack.c.h.b16 %v1146
        %v1189 = vunpack.c.l.b16 %v1147
        %v1190 = vunpack.c.h.b16 %v1147
        %v1191 = vunpack.c.l.b16 %v1148
        %v1192 = vunpack.c.h.b16 %v1148
        %v1193 = vunpack.c.l.b16 %v1149
        %v1194 = vunpack.c.h.b16 %v1149
        %v1195 = vunpack.c.l.b16 %v1150
        %v1196 = vunpack.c.h.b16 %v1150
        %v1197 = vunpack.c.l.b16 %v1151
        %v1198 = vunpack.c.h.b16 %v1151
        %v1199 = vunpack.c.l.b16 %v1152
        %v1200 = vunpack.c.h.b16 %v1152
        %v1201 = vpack.c.b16 %v1171, %v1169
        %v1202 = vpack.c.b16 %v1172, %v1170
        %v1203 = vpack.c.b16 %v1175, %v1173
        %v1204 = vpack.c.b16 %v1176, %v1174
        %v1205 = vpack.c.b16 %v1179, %v1177
        %v1206 = vpack.c.b16 %v1180, %v1178
        %v1207 = vpack.c.b16 %v1183, %v1181
        %v1208 = vpack.c.b16 %v1184, %v1182
        %v1209 = vpack.c.b16 %v1187, %v1185
        %v1210 = vpack.c.b16 %v1188, %v1186
        %v1211 = vpack.c.b16 %v1191, %v1189
        %v1212 = vpack.c.b16 %v1192, %v1190
        %v1213 = vpack.c.b16 %v1195, %v1193
        %v1214 = vpack.c.b16 %v1196, %v1194
        %v1215 = vpack.c.b16 %v1199, %v1197
        %v1216 = vpack.c.b16 %v1200, %v1198
        %1233 = vmatprep.subr.bf16.mxu0 %v1202
        %1234 = vmatpush1.bf16.msra.mxu0 %v1201
        %1235 = vmatprep.subr.bf16.mxu0 %v1204
        %1236 = vmatpush1.bf16.msra.mxu0 %v1203
        %1237 = vmatprep.subr.bf16.mxu0 %v1206
        %1238 = vmatpush1.bf16.msra.mxu0 %v1205
        %1239 = vmatprep.subr.bf16.mxu0 %v1208
        %1240 = vmatpush1.bf16.msra.mxu0 %v1207
        %1241 = vmatprep.subr.bf16.mxu0 %v1210
        %1242 = vmatpush1.bf16.msra.mxu0 %v1209
        %1243 = vmatprep.subr.bf16.mxu0 %v1212
        %1244 = vmatpush1.bf16.msra.mxu0 %v1211
        %1245 = vmatprep.subr.bf16.mxu0 %v1214
        %1246 = vmatpush1.bf16.msra.mxu0 %v1213
        %1247 = vmatprep.subr.bf16.mxu0 %v1216
        %1248 = vmatpush1.bf16.msra.mxu0 %v1215
        %1249 = vmatprep.subr.bf16.mxu0 0
        %1250 = vmatpush1.bf16.msra.mxu0 0
        %1251 = vmatprep.subr.bf16.mxu0 0
        %1252 = vmatpush1.bf16.msra.mxu0 0
        %1253 = vmatprep.subr.bf16.mxu0 0
        %1254 = vmatpush1.bf16.msra.mxu0 0
        %1255 = vmatprep.subr.bf16.mxu0 0
        %1256 = vmatpush1.bf16.msra.mxu0 0
        %1257 = vmatprep.subr.bf16.mxu0 0
        %1258 = vmatpush1.bf16.msra.mxu0 0
        %1259 = vmatprep.subr.bf16.mxu0 0
        %1260 = vmatpush1.bf16.msra.mxu0 0
        %1261 = vmatprep.subr.bf16.mxu0 0
        %1262 = vmatpush1.bf16.msra.mxu0 0
        %1263 = vmatprep.subr.bf16.mxu0 0
        %1264 = vmatpush1.bf16.msra.mxu0 0
        %1265 = vmatprep.mubr.bf16.mxu0 0
        %1266 = vmatmul.mubr.bf16.gmra.mrb[0].mxu0 %v1004
        %v1267 = vpop.f32.mrb[0].mxu0
        %v1268 = vadd.f32 0.0, %v1267
        %v1269 = vpop.f32.mrb[0].mxu0
        %v1270 = vadd.f32 0.0, %v1269
        %v1271 = vpop.f32.mrb[0].mxu0
        %v1272 = vadd.f32 0.0, %v1271
        %v1273 = vpop.f32.mrb[0].mxu0
        %v1274 = vadd.f32 0.0, %v1273
        %1275 = vdwg.mxu0
        %v1276 = vadd.f32 %v1129, %v1268
        %v1277 = vadd.f32 %v1131, %v1270
        %v1278 = vadd.f32 %v1133, %v1272
        %v1279 = vadd.f32 %v1135, %v1274
        %v1280 = vld [vmem:[%s8] sm:$0xff]
        %v1281 = vld [vmem:[%s8 + $0x8] sm:$0xff]
        %v1282 = vld [vmem:[%s8 + $0x10] sm:$0xff]
        %v1283 = vld [vmem:[%s8 + $0x18] sm:$0xff]
        %v1284 = vld [vmem:[%s8 + $0x20] sm:$0xff]
        %v1285 = vld [vmem:[%s8 + $0x28] sm:$0xff]
        %v1286 = vld [vmem:[%s8 + $0x30] sm:$0xff]
        %v1287 = vld [vmem:[%s8 + $0x38] sm:$0xff]
        %v1288 = vld [vmem:[%s8 + $0x40] sm:$0xff]
        %v1289 = vld [vmem:[%s8 + $0x48] sm:$0xff]
        %v1290 = vld [vmem:[%s8 + $0x50] sm:$0xff]
        %v1291 = vld [vmem:[%s8 + $0x58] sm:$0xff]
        %v1292 = vld [vmem:[%s8 + $0x60] sm:$0xff]
        %v1293 = vld [vmem:[%s8 + $0x68] sm:$0xff]
        %v1294 = vld [vmem:[%s8 + $0x70] sm:$0xff]
        %v1295 = vld [vmem:[%s8 + $0x78] sm:$0xff]
        %v1312 = vunpack.c.l.b16 %v1280
        %v1313 = vunpack.c.h.b16 %v1280
        %v1314 = vunpack.c.l.b16 %v1281
        %v1315 = vunpack.c.h.b16 %v1281
        %v1316 = vunpack.c.l.b16 %v1282
        %v1317 = vunpack.c.h.b16 %v1282
        %v1318 = vunpack.c.l.b16 %v1283
        %v1319 = vunpack.c.h.b16 %v1283
        %v1320 = vunpack.c.l.b16 %v1284
        %v1321 = vunpack.c.h.b16 %v1284
        %v1322 = vunpack.c.l.b16 %v1285
        %v1323 = vunpack.c.h.b16 %v1285
        %v1324 = vunpack.c.l.b16 %v1286
        %v1325 = vunpack.c.h.b16 %v1286
        %v1326 = vunpack.c.l.b16 %v1287
        %v1327 = vunpack.c.h.b16 %v1287
        %v1328 = vunpack.c.l.b16 %v1288
        %v1329 = vunpack.c.h.b16 %v1288
        %v1330 = vunpack.c.l.b16 %v1289
        %v1331 = vunpack.c.h.b16 %v1289
        %v1332 = vunpack.c.l.b16 %v1290
        %v1333 = vunpack.c.h.b16 %v1290
        %v1334 = vunpack.c.l.b16 %v1291
        %v1335 = vunpack.c.h.b16 %v1291
        %v1336 = vunpack.c.l.b16 %v1292
        %v1337 = vunpack.c.h.b16 %v1292
        %v1338 = vunpack.c.l.b16 %v1293
        %v1339 = vunpack.c.h.b16 %v1293
        %v1340 = vunpack.c.l.b16 %v1294
        %v1341 = vunpack.c.h.b16 %v1294
        %v1342 = vunpack.c.l.b16 %v1295
        %v1343 = vunpack.c.h.b16 %v1295
        %v1344 = vpack.c.b16 %v1314, %v1312
        %v1345 = vpack.c.b16 %v1315, %v1313
        %v1346 = vpack.c.b16 %v1318, %v1316
        %v1347 = vpack.c.b16 %v1319, %v1317
        %v1348 = vpack.c.b16 %v1322, %v1320
        %v1349 = vpack.c.b16 %v1323, %v1321
        %v1350 = vpack.c.b16 %v1326, %v1324
        %v1351 = vpack.c.b16 %v1327, %v1325
        %v1352 = vpack.c.b16 %v1330, %v1328
        %v1353 = vpack.c.b16 %v1331, %v1329
        %v1354 = vpack.c.b16 %v1334, %v1332
        %v1355 = vpack.c.b16 %v1335, %v1333
        %v1356 = vpack.c.b16 %v1338, %v1336
        %v1357 = vpack.c.b16 %v1339, %v1337
        %v1358 = vpack.c.b16 %v1342, %v1340
        %v1359 = vpack.c.b16 %v1343, %v1341
        %1376 = vmatprep.subr.bf16.mxu0 %v1345
        %1377 = vmatpush1.bf16.msra.mxu0 %v1344
        %1378 = vmatprep.subr.bf16.mxu0 %v1347
        %1379 = vmatpush1.bf16.msra.mxu0 %v1346
        %1380 = vmatprep.subr.bf16.mxu0 %v1349
        %1381 = vmatpush1.bf16.msra.mxu0 %v1348
        %1382 = vmatprep.subr.bf16.mxu0 %v1351
        %1383 = vmatpush1.bf16.msra.mxu0 %v1350
        %1384 = vmatprep.subr.bf16.mxu0 %v1353
        %1385 = vmatpush1.bf16.msra.mxu0 %v1352
        %1386 = vmatprep.subr.bf16.mxu0 %v1355
        %1387 = vmatpush1.bf16.msra.mxu0 %v1354
        %1388 = vmatprep.subr.bf16.mxu0 %v1357
        %1389 = vmatpush1.bf16.msra.mxu0 %v1356
        %1390 = vmatprep.subr.bf16.mxu0 %v1359
        %1391 = vmatpush1.bf16.msra.mxu0 %v1358
        %1392 = vmatprep.subr.bf16.mxu0 0
        %1393 = vmatpush1.bf16.msra.mxu0 0
        %1394 = vmatprep.subr.bf16.mxu0 0
        %1395 = vmatpush1.bf16.msra.mxu0 0
        %1396 = vmatprep.subr.bf16.mxu0 0
        %1397 = vmatpush1.bf16.msra.mxu0 0
        %1398 = vmatprep.subr.bf16.mxu0 0
        %1399 = vmatpush1.bf16.msra.mxu0 0
        %1400 = vmatprep.subr.bf16.mxu0 0
        %1401 = vmatpush1.bf16.msra.mxu0 0
        %1402 = vmatprep.subr.bf16.mxu0 0
        %1403 = vmatpush1.bf16.msra.mxu0 0
        %1404 = vmatprep.subr.bf16.mxu0 0
        %1405 = vmatpush1.bf16.msra.mxu0 0
        %1406 = vmatprep.subr.bf16.mxu0 0
        %1407 = vmatpush1.bf16.msra.mxu0 0
        %1408 = vmatprep.mubr.bf16.mxu0 0
        %1409 = vmatmul.mubr.bf16.gmra.mrb[0].mxu0 %v1007
        %v1410 = vpop.f32.mrb[0].mxu0
        %v1411 = vadd.f32 0.0, %v1410
        %v1412 = vpop.f32.mrb[0].mxu0
        %v1413 = vadd.f32 0.0, %v1412
        %v1414 = vpop.f32.mrb[0].mxu0
        %v1415 = vadd.f32 0.0, %v1414
        %v1416 = vpop.f32.mrb[0].mxu0
        %v1417 = vadd.f32 0.0, %v1416
        %1418 = vdwg.mxu0
        %v1419 = vadd.f32 %v1276, %v1411
        %v1420 = vadd.f32 %v1277, %v1413
        %v1421 = vadd.f32 %v1278, %v1415
        %v1422 = vadd.f32 %v1279, %v1417
        %v1423 = vld [vmem:[#allocation15] sm:$0x3]
        %v1425 = vlaneseq
        %v1426 = vshrl.u32 %v1425, 7
        %v1427 = vsub.s32 0, %v1426
        %v1428 = vrot.slane %v1423, %v1427
        %v1429 = vlaneseq
        %v1430 = vshrl.u32 %v1429, 7
        %v1431 = vsub.s32 1, %v1430
        %v1432 = vrot.slane %v1423, %v1431
        %v1435 = vadd.f32 %v1419, %v1428
        %v1436 = vadd.f32 %v1420, %v1432
        %v1437 = vadd.f32 %v1421, %v1428
        %v1438 = vadd.f32 %v1422, %v1432
        %v1439 = vld [vmem:[#allocation17] sm:$0x1]
        %v1440 = vld [vmem:[#allocation18] sm:$0x1]
        %1441 = vadd.xlane.f32.xlu0 %v1435
        %v1442 = vpop.xlane.xlu0 %1441
        %1443 = vadd.xlane.f32.xlu0 %v1437
        %v1444 = vpop.xlane.xlu0 %1443
        %v1445 = vrcp.pop 128.0
        %v1446 = vmul.f32 %v1442, %v1445
        %v1447 = vmul.f32 %v1444, %v1445
        %v1448 = vsub.f32 %v1435, %v1446
        %v1449 = vsub.f32 %v1437, %v1447
        %v1450 = vmul.f32 %v1448, %v1448
        %v1451 = vmul.f32 %v1449, %v1449
        %1452 = vadd.xlane.f32.xlu0 %v1450
        %v1453 = vpop.xlane.xlu0 %1452
        %1454 = vadd.xlane.f32.xlu0 %v1451
        %v1455 = vpop.xlane.xlu0 %1454
        %v1456 = vmul.f32 %v1453, %v1445
        %v1457 = vmul.f32 %v1455, %v1445
        %v1458 = vadd.f32 %v1456, 1e-05
        %v1459 = vadd.f32 %v1457, 1e-05
        %v1460 = vrsqrt.pop %v1458
        %v1461 = vrsqrt.pop %v1459
        %v1462 = vmul.f32 %v1448, %v1460
        %v1463 = vmul.f32 %v1449, %v1461
        %v1465 = vlaneseq
        %v1466 = vshrl.u32 %v1465, 7
        %v1467 = vsub.s32 0, %v1466
        %v1468 = vrot.slane %v1439, %v1467
        %v1470 = vmul.f32 %v1462, %v1468
        %v1471 = vmul.f32 %v1463, %v1468
        %v1473 = vlaneseq
        %v1474 = vshrl.u32 %v1473, 7
        %v1475 = vsub.s32 0, %v1474
        %v1476 = vrot.slane %v1440, %v1475
        %v1478 = vadd.f32 %v1470, %v1476
        %v1479 = vadd.f32 %v1471, %v1476
        %v1480 = vmax.f32 %v1478, 0.0
        %v1481 = vmax.f32 %v1479, 0.0
        %v1482 = vpack.c.bf16 %v1481, %v1480
        %v1483 = vld [vmem:[%s14] sm:$0xf]
        %v1484 = vld [vmem:[%s14 + $0x4] sm:$0xf]
        %v1485 = vld [vmem:[%s14 + $0x8] sm:$0xf]
        %v1486 = vld [vmem:[%s14 + $0xc] sm:$0xf]
        %v1487 = vld [vmem:[%s14 + $0x10] sm:$0xf]
        %v1488 = vld [vmem:[%s14 + $0x14] sm:$0xf]
        %v1489 = vld [vmem:[%s14 + $0x18] sm:$0xf]
        %v1490 = vld [vmem:[%s14 + $0x1c] sm:$0xf]
        %v1491 = vld [vmem:[%s14 + $0x20] sm:$0xf]
        %v1492 = vld [vmem:[%s14 + $0x24] sm:$0xf]
        %v1493 = vld [vmem:[%s14 + $0x28] sm:$0xf]
        %v1494 = vld [vmem:[%s14 + $0x2c] sm:$0xf]
        %v1495 = vld [vmem:[%s14 + $0x30] sm:$0xf]
        %v1496 = vld [vmem:[%s14 + $0x34] sm:$0xf]
        %v1497 = vld [vmem:[%s14 + $0x38] sm:$0xf]
        %v1498 = vld [vmem:[%s14 + $0x3c] sm:$0xf]
        %v1499 = vld [vmem:[#allocation23] sm:$0x1]
        %v1501 = vlaneseq
        %v1502 = vshrl.u32 %v1501, 7
        %v1503 = vsub.s32 0, %v1502
        %v1504 = vrot.slane %v1499, %v1503
        %v1522 = vunpack.c.l.b16 %v1483
        %v1523 = vunpack.c.l.b16 %v1484
        %v1524 = vunpack.c.l.b16 %v1485
        %v1525 = vunpack.c.l.b16 %v1486
        %v1526 = vunpack.c.l.b16 %v1487
        %v1527 = vunpack.c.l.b16 %v1488
        %v1528 = vunpack.c.l.b16 %v1489
        %v1529 = vunpack.c.l.b16 %v1490
        %v1530 = vunpack.c.l.b16 %v1491
        %v1531 = vunpack.c.l.b16 %v1492
        %v1532 = vunpack.c.l.b16 %v1493
        %v1533 = vunpack.c.l.b16 %v1494
        %v1534 = vunpack.c.l.b16 %v1495
        %v1535 = vunpack.c.l.b16 %v1496
        %v1536 = vunpack.c.l.b16 %v1497
        %v1537 = vunpack.c.l.b16 %v1498
        %v1538 = vpack.c.b16 %v1523, %v1522
        %v1539 = vpack.c.b16 %v1525, %v1524
        %v1540 = vpack.c.b16 %v1527, %v1526
        %v1541 = vpack.c.b16 %v1529, %v1528
        %v1542 = vpack.c.b16 %v1531, %v1530
        %v1543 = vpack.c.b16 %v1533, %v1532
        %v1544 = vpack.c.b16 %v1535, %v1534
        %v1545 = vpack.c.b16 %v1537, %v1536
        %1554 = vmatprep.subr.bf16.mxu0 0
        %1555 = vmatpush1.bf16.msra.mxu0 %v1538
        %1556 = vmatprep.subr.bf16.mxu0 0
        %1557 = vmatpush1.bf16.msra.mxu0 %v1539
        %1558 = vmatprep.subr.bf16.mxu0 0
        %1559 = vmatpush1.bf16.msra.mxu0 %v1540
        %1560 = vmatprep.subr.bf16.mxu0 0
        %1561 = vmatpush1.bf16.msra.mxu0 %v1541
        %1562 = vmatprep.subr.bf16.mxu0 0
        %1563 = vmatpush1.bf16.msra.mxu0 %v1542
        %1564 = vmatprep.subr.bf16.mxu0 0
        %1565 = vmatpush1.bf16.msra.mxu0 %v1543
        %1566 = vmatprep.subr.bf16.mxu0 0
        %1567 = vmatpush1.bf16.msra.mxu0 %v1544
        %1568 = vmatprep.subr.bf16.mxu0 0
        %1569 = vmatpush1.bf16.msra.mxu0 %v1545
        %1570 = vmatprep.subr.bf16.mxu0 0
        %1571 = vmatpush1.bf16.msra.mxu0 0
        %1572 = vmatprep.subr.bf16.mxu0 0
        %1573 = vmatpush1.bf16.msra.mxu0 0
        %1574 = vmatprep.subr.bf16.mxu0 0
        %1575 = vmatpush1.bf16.msra.mxu0 0
        %1576 = vmatprep.subr.bf16.mxu0 0
        %1577 = vmatpush1.bf16.msra.mxu0 0
        %1578 = vmatprep.subr.bf16.mxu0 0
        %1579 = vmatpush1.bf16.msra.mxu0 0
        %1580 = vmatprep.subr.bf16.mxu0 0
        %1581 = vmatpush1.bf16.msra.mxu0 0
        %1582 = vmatprep.subr.bf16.mxu0 0
        %1583 = vmatpush1.bf16.msra.mxu0 0
        %1584 = vmatprep.subr.bf16.mxu0 0
        %1585 = vmatpush1.bf16.msra.mxu0 0
        %1586 = vmatprep.mubr.bf16.mxu0 0
        %1587 = vmatmul.mubr.bf16.gmra.mrb[0].mxu0 %v1482
        %v1588 = vpop.f32.mrb[0].mxu0
        %v1589 = vadd.f32 %v1504, %v1588
        %v1590 = vpop.f32.mrb[0].mxu0
        %v1591 = vpop.f32.mrb[0].mxu0
        %v1592 = vadd.f32 %v1504, %v1591
        %v1593 = vpop.f32.mrb[0].mxu0
        %1594 = vdwg.mxu0
        %v1595 = vld [vmem:[#allocation20] sm:$0x1]
        %v1596 = vld [vmem:[#allocation21] sm:$0x1]
        %1597 = vadd.xlane.f32.xlu0 %v1436
        %v1598 = vpop.xlane.xlu0 %1597
        %1599 = vadd.xlane.f32.xlu0 %v1438
        %v1600 = vpop.xlane.xlu0 %1599
        %v1601 = vmul.f32 %v1598, %v1445
        %v1602 = vmul.f32 %v1600, %v1445
        %v1603 = vsub.f32 %v1436, %v1601
        %v1604 = vsub.f32 %v1438, %v1602
        %v1605 = vmul.f32 %v1603, %v1603
        %v1606 = vmul.f32 %v1604, %v1604
        %1607 = vadd.xlane.f32.xlu0 %v1605
        %v1608 = vpop.xlane.xlu0 %1607
        %1609 = vadd.xlane.f32.xlu0 %v1606
        %v1610 = vpop.xlane.xlu0 %1609
        %v1611 = vmul.f32 %v1608, %v1445
        %v1612 = vmul.f32 %v1610, %v1445
        %v1613 = vadd.f32 %v1611, 1e-05
        %v1614 = vadd.f32 %v1612, 1e-05
        %v1615 = vrsqrt.pop %v1613
        %v1616 = vrsqrt.pop %v1614
        %v1617 = vmul.f32 %v1603, %v1615
        %v1618 = vmul.f32 %v1604, %v1616
        %v1620 = vlaneseq
        %v1621 = vshrl.u32 %v1620, 7
        %v1622 = vsub.s32 0, %v1621
        %v1623 = vrot.slane %v1595, %v1622
        %v1625 = vmul.f32 %v1617, %v1623
        %v1626 = vmul.f32 %v1618, %v1623
        %v1628 = vlaneseq
        %v1629 = vshrl.u32 %v1628, 7
        %v1630 = vsub.s32 0, %v1629
        %v1631 = vrot.slane %v1596, %v1630
        %v1633 = vadd.f32 %v1625, %v1631
        %v1634 = vadd.f32 %v1626, %v1631
        %v1635 = vmax.f32 %v1633, 0.0
        %v1636 = vmax.f32 %v1634, 0.0
        %v1637 = vpack.c.bf16 %v1636, %v1635
        %v1638 = vld [vmem:[#allocation24] sm:$0xf]
        %v1639 = vld [vmem:[#allocation24 + $0x4] sm:$0xf]
        %v1640 = vld [vmem:[#allocation24 + $0x8] sm:$0xf]
        %v1641 = vld [vmem:[#allocation24 + $0xc] sm:$0xf]
        %v1642 = vld [vmem:[#allocation24 + $0x10] sm:$0xf]
        %v1643 = vld [vmem:[#allocation24 + $0x14] sm:$0xf]
        %v1644 = vld [vmem:[#allocation24 + $0x18] sm:$0xf]
        %v1645 = vld [vmem:[#allocation24 + $0x1c] sm:$0xf]
        %v1646 = vld [vmem:[#allocation24 + $0x20] sm:$0xf]
        %v1647 = vld [vmem:[#allocation24 + $0x24] sm:$0xf]
        %v1648 = vld [vmem:[#allocation24 + $0x28] sm:$0xf]
        %v1649 = vld [vmem:[#allocation24 + $0x2c] sm:$0xf]
        %v1650 = vld [vmem:[#allocation24 + $0x30] sm:$0xf]
        %v1651 = vld [vmem:[#allocation24 + $0x34] sm:$0xf]
        %v1652 = vld [vmem:[#allocation24 + $0x38] sm:$0xf]
        %v1653 = vld [vmem:[#allocation24 + $0x3c] sm:$0xf]
        %v1654 = vld [vmem:[%s17] sm:$0x1]
        %v1656 = vlaneseq
        %v1657 = vshrl.u32 %v1656, 7
        %v1658 = vsub.s32 0, %v1657
        %v1659 = vrot.slane %v1654, %v1658
        %v1677 = vunpack.c.l.b16 %v1638
        %v1678 = vunpack.c.l.b16 %v1639
        %v1679 = vunpack.c.l.b16 %v1640
        %v1680 = vunpack.c.l.b16 %v1641
        %v1681 = vunpack.c.l.b16 %v1642
        %v1682 = vunpack.c.l.b16 %v1643
        %v1683 = vunpack.c.l.b16 %v1644
        %v1684 = vunpack.c.l.b16 %v1645
        %v1685 = vunpack.c.l.b16 %v1646
        %v1686 = vunpack.c.l.b16 %v1647
        %v1687 = vunpack.c.l.b16 %v1648
        %v1688 = vunpack.c.l.b16 %v1649
        %v1689 = vunpack.c.l.b16 %v1650
        %v1690 = vunpack.c.l.b16 %v1651
        %v1691 = vunpack.c.l.b16 %v1652
        %v1692 = vunpack.c.l.b16 %v1653
        %v1693 = vpack.c.b16 %v1678, %v1677
        %v1694 = vpack.c.b16 %v1680, %v1679
        %v1695 = vpack.c.b16 %v1682, %v1681
        %v1696 = vpack.c.b16 %v1684, %v1683
        %v1697 = vpack.c.b16 %v1686, %v1685
        %v1698 = vpack.c.b16 %v1688, %v1687
        %v1699 = vpack.c.b16 %v1690, %v1689
        %v1700 = vpack.c.b16 %v1692, %v1691
        %1709 = vmatprep.subr.bf16.mxu0 0
        %1710 = vmatpush1.bf16.msra.mxu0 %v1693
        %1711 = vmatprep.subr.bf16.mxu0 0
        %1712 = vmatpush1.bf16.msra.mxu0 %v1694
        %1713 = vmatprep.subr.bf16.mxu0 0
        %1714 = vmatpush1.bf16.msra.mxu0 %v1695
        %1715 = vmatprep.subr.bf16.mxu0 0
        %1716 = vmatpush1.bf16.msra.mxu0 %v1696
        %1717 = vmatprep.subr.bf16.mxu0 0
        %1718 = vmatpush1.bf16.msra.mxu0 %v1697
        %1719 = vmatprep.subr.bf16.mxu0 0
        %1720 = vmatpush1.bf16.msra.mxu0 %v1698
        %1721 = vmatprep.subr.bf16.mxu0 0
        %1722 = vmatpush1.bf16.msra.mxu0 %v1699
        %1723 = vmatprep.subr.bf16.mxu0 0
        %1724 = vmatpush1.bf16.msra.mxu0 %v1700
        %1725 = vmatprep.subr.bf16.mxu0 0
        %1726 = vmatpush1.bf16.msra.mxu0 0
        %1727 = vmatprep.subr.bf16.mxu0 0
        %1728 = vmatpush1.bf16.msra.mxu0 0
        %1729 = vmatprep.subr.bf16.mxu0 0
        %1730 = vmatpush1.bf16.msra.mxu0 0
        %1731 = vmatprep.subr.bf16.mxu0 0
        %1732 = vmatpush1.bf16.msra.mxu0 0
        %1733 = vmatprep.subr.bf16.mxu0 0
        %1734 = vmatpush1.bf16.msra.mxu0 0
        %1735 = vmatprep.subr.bf16.mxu0 0
        %1736 = vmatpush1.bf16.msra.mxu0 0
        %1737 = vmatprep.subr.bf16.mxu0 0
        %1738 = vmatpush1.bf16.msra.mxu0 0
        %1739 = vmatprep.subr.bf16.mxu0 0
        %1740 = vmatpush1.bf16.msra.mxu0 0
        %1741 = vmatprep.mubr.bf16.mxu0 0
        %1742 = vmatmul.mubr.bf16.gmra.mrb[0].mxu0 %v1637
        %v1743 = vpop.f32.mrb[0].mxu0
        %v1744 = vadd.f32 %v1659, %v1743
        %v1745 = vpop.f32.mrb[0].mxu0
        %v1746 = vpop.f32.mrb[0].mxu0
        %v1747 = vadd.f32 %v1659, %v1746
        %v1748 = vpop.f32.mrb[0].mxu0
        %1749 = vdwg.mxu0
        %v1750 = vld [vmem:[%s24] sm:$0x1]
        %v1752 = vlaneseq
        %v1753 = vshrl.u32 %v1752, 7
        %v1754 = vsub.s32 0, %v1753
        %v1755 = vrot.slane %v1750, %v1754
        %v1757 = vmul.f32 %v1008, %v1755
        %v1758 = vmul.f32 %v1009, %v1755
        %v1759 = vsel %vm1027, %v1757, 0.0
        %1760 = vadd.xlane.f32.xlu0 %v1759
        %v1761 = vpop.xlane.xlu0 %1760
        %v1762 = vsel %vm1027, %v1758, 0.0
        %1763 = vadd.xlane.f32.xlu0 %v1762
        %v1764 = vpop.xlane.xlu0 %1763
        %v1765 = vld [vmem:[#allocation8] sm:$0x1]
        %v1767 = vlaneseq
        %v1768 = vshrl.u32 %v1767, 7
        %v1769 = vsub.s32 0, %v1768
        %v1770 = vrot.slane %v1765, %v1769
        %v1772 = vadd.f32 %v1761, %v1770
        %v1773 = vadd.f32 %v1764, %v1770
        %v1774 = vxor.u32 %v1772, 2147483648
        %v1775 = vxor.u32 %v1773, 2147483648
        %v1776 = vmul.f32 %v1774, 1.442695
        %v1777 = vpow.pop %v1776
        %v1778 = vmul.f32 %v1775, 1.442695
        %v1779 = vpow.pop %v1778
        %v1780 = vadd.f32 %v1777, 1.0
        %v1781 = vadd.f32 %v1779, 1.0
        %v1782 = vrcp.pop %v1780
        %v1783 = vmul.f32 1.0, %v1782
        %v1784 = vrcp.pop %v1781
        %v1785 = vmul.f32 1.0, %v1784
        %1787 = vset.pattern.permute.xlu0 0
        %1788 = vperm.xlu0 %1787, %v1783
        %v1789 = vpop.permute.xlu0 %1788
        %1792 = vset.pattern.permute.xlu0 0
        %1793 = vperm.xlu0 %1792, %v1785
        %v1794 = vpop.permute.xlu0 %1793
        %v1796 = vmul.f32 %v1744, %v1789
        %v1797 = vmul.f32 %v1747, %v1794
        %v1798 = vld [vmem:[#allocation26] sm:$0xf]
        %v1799 = vld [vmem:[#allocation26 + $0x4] sm:$0xf]
        %v1800 = vld [vmem:[#allocation26 + $0x8] sm:$0xf]
        %v1801 = vld [vmem:[#allocation26 + $0xc] sm:$0xf]
        %v1802 = vld [vmem:[#allocation26 + $0x10] sm:$0xf]
        %v1803 = vld [vmem:[#allocation26 + $0x14] sm:$0xf]
        %v1804 = vld [vmem:[#allocation26 + $0x18] sm:$0xf]
        %v1805 = vld [vmem:[#allocation26 + $0x1c] sm:$0xf]
        %v1806 = vld [vmem:[#allocation26 + $0x20] sm:$0xf]
        %v1807 = vld [vmem:[#allocation26 + $0x24] sm:$0xf]
        %v1808 = vld [vmem:[#allocation26 + $0x28] sm:$0xf]
        %v1809 = vld [vmem:[#allocation26 + $0x2c] sm:$0xf]
        %v1810 = vld [vmem:[#allocation26 + $0x30] sm:$0xf]
        %v1811 = vld [vmem:[#allocation26 + $0x34] sm:$0xf]
        %v1812 = vld [vmem:[#allocation26 + $0x38] sm:$0xf]
        %v1813 = vld [vmem:[#allocation26 + $0x3c] sm:$0xf]
        %v1814 = vld [vmem:[%s19] sm:$0x1]
        %v1816 = vlaneseq
        %v1817 = vshrl.u32 %v1816, 7
        %v1818 = vsub.s32 0, %v1817
        %v1819 = vrot.slane %v1814, %v1818
        %v1837 = vunpack.c.l.b16 %v1798
        %v1838 = vunpack.c.l.b16 %v1799
        %v1839 = vunpack.c.l.b16 %v1800
        %v1840 = vunpack.c.l.b16 %v1801
        %v1841 = vunpack.c.l.b16 %v1802
        %v1842 = vunpack.c.l.b16 %v1803
        %v1843 = vunpack.c.l.b16 %v1804
        %v1844 = vunpack.c.l.b16 %v1805
        %v1845 = vunpack.c.l.b16 %v1806
        %v1846 = vunpack.c.l.b16 %v1807
        %v1847 = vunpack.c.l.b16 %v1808
        %v1848 = vunpack.c.l.b16 %v1809
        %v1849 = vunpack.c.l.b16 %v1810
        %v1850 = vunpack.c.l.b16 %v1811
        %v1851 = vunpack.c.l.b16 %v1812
        %v1852 = vunpack.c.l.b16 %v1813
        %v1853 = vpack.c.b16 %v1838, %v1837
        %v1854 = vpack.c.b16 %v1840, %v1839
        %v1855 = vpack.c.b16 %v1842, %v1841
        %v1856 = vpack.c.b16 %v1844, %v1843
        %v1857 = vpack.c.b16 %v1846, %v1845
        %v1858 = vpack.c.b16 %v1848, %v1847
        %v1859 = vpack.c.b16 %v1850, %v1849
        %v1860 = vpack.c.b16 %v1852, %v1851
        %1869 = vmatprep.subr.bf16.mxu0 0
        %1870 = vmatpush1.bf16.msra.mxu0 %v1853
        %1871 = vmatprep.subr.bf16.mxu0 0
        %1872 = vmatpush1.bf16.msra.mxu0 %v1854
        %1873 = vmatprep.subr.bf16.mxu0 0
        %1874 = vmatpush1.bf16.msra.mxu0 %v1855
        %1875 = vmatprep.subr.bf16.mxu0 0
        %1876 = vmatpush1.bf16.msra.mxu0 %v1856
        %1877 = vmatprep.subr.bf16.mxu0 0
        %1878 = vmatpush1.bf16.msra.mxu0 %v1857
        %1879 = vmatprep.subr.bf16.mxu0 0
        %1880 = vmatpush1.bf16.msra.mxu0 %v1858
        %1881 = vmatprep.subr.bf16.mxu0 0
        %1882 = vmatpush1.bf16.msra.mxu0 %v1859
        %1883 = vmatprep.subr.bf16.mxu0 0
        %1884 = vmatpush1.bf16.msra.mxu0 %v1860
        %1885 = vmatprep.subr.bf16.mxu0 0
        %1886 = vmatpush1.bf16.msra.mxu0 0
        %1887 = vmatprep.subr.bf16.mxu0 0
        %1888 = vmatpush1.bf16.msra.mxu0 0
        %1889 = vmatprep.subr.bf16.mxu0 0
        %1890 = vmatpush1.bf16.msra.mxu0 0
        %1891 = vmatprep.subr.bf16.mxu0 0
        %1892 = vmatpush1.bf16.msra.mxu0 0
        %1893 = vmatprep.subr.bf16.mxu0 0
        %1894 = vmatpush1.bf16.msra.mxu0 0
        %1895 = vmatprep.subr.bf16.mxu0 0
        %1896 = vmatpush1.bf16.msra.mxu0 0
        %1897 = vmatprep.subr.bf16.mxu0 0
        %1898 = vmatpush1.bf16.msra.mxu0 0
        %1899 = vmatprep.subr.bf16.mxu0 0
        %1900 = vmatpush1.bf16.msra.mxu0 0
        %1901 = vmatprep.mubr.bf16.mxu0 0
        %1902 = vmatmul.mubr.bf16.gmra.mrb[0].mxu0 %v1004
        %v1903 = vpop.f32.mrb[0].mxu0
        %v1904 = vadd.f32 %v1819, %v1903
        %v1905 = vpop.f32.mrb[0].mxu0
        %v1906 = vpop.f32.mrb[0].mxu0
        %v1907 = vadd.f32 %v1819, %v1906
        %v1908 = vpop.f32.mrb[0].mxu0
        %1909 = vdwg.mxu0
        %v1910 = vld [vmem:[%s20] sm:$0x1]
        %v1911 = vld [vmem:[%s21] sm:$0x1]
        %1912 = vadd.xlane.f32.xlu0 %v1904
        %v1913 = vpop.xlane.xlu0 %1912
        %1914 = vadd.xlane.f32.xlu0 %v1907
        %v1915 = vpop.xlane.xlu0 %1914
        %v1916 = vmul.f32 %v1913, %v1445
        %v1917 = vmul.f32 %v1915, %v1445
        %v1918 = vsub.f32 %v1904, %v1916
        %v1919 = vsub.f32 %v1907, %v1917
        %v1920 = vmul.f32 %v1918, %v1918
        %v1921 = vmul.f32 %v1919, %v1919
        %1922 = vadd.xlane.f32.xlu0 %v1920
        %v1923 = vpop.xlane.xlu0 %1922
        %1924 = vadd.xlane.f32.xlu0 %v1921
        %v1925 = vpop.xlane.xlu0 %1924
        %v1926 = vmul.f32 %v1923, %v1445
        %v1927 = vmul.f32 %v1925, %v1445
        %v1928 = vadd.f32 %v1926, 1e-05
        %v1929 = vadd.f32 %v1927, 1e-05
        %v1930 = vrsqrt.pop %v1928
        %v1931 = vrsqrt.pop %v1929
        %v1932 = vmul.f32 %v1918, %v1930
        %v1933 = vmul.f32 %v1919, %v1931
        %v1935 = vlaneseq
        %v1936 = vshrl.u32 %v1935, 7
        %v1937 = vsub.s32 0, %v1936
        %v1938 = vrot.slane %v1910, %v1937
        %v1940 = vmul.f32 %v1932, %v1938
        %v1941 = vmul.f32 %v1933, %v1938
        %v1943 = vlaneseq
        %v1944 = vshrl.u32 %v1943, 7
        %v1945 = vsub.s32 0, %v1944
        %v1946 = vrot.slane %v1911, %v1945
        %v1948 = vadd.f32 %v1940, %v1946
        %v1949 = vadd.f32 %v1941, %v1946
        %v1950 = vmax.f32 %v1948, 0.0
        %v1951 = vmax.f32 %v1949, 0.0
        %v1952 = vpack.c.bf16 %v1951, %v1950
        %v1953 = vld [vmem:[#allocation27] sm:$0xf]
        %v1954 = vld [vmem:[#allocation27 + $0x4] sm:$0xf]
        %v1955 = vld [vmem:[#allocation27 + $0x8] sm:$0xf]
        %v1956 = vld [vmem:[#allocation27 + $0xc] sm:$0xf]
        %v1957 = vld [vmem:[#allocation27 + $0x10] sm:$0xf]
        %v1958 = vld [vmem:[#allocation27 + $0x14] sm:$0xf]
        %v1959 = vld [vmem:[#allocation27 + $0x18] sm:$0xf]
        %v1960 = vld [vmem:[#allocation27 + $0x1c] sm:$0xf]
        %v1961 = vld [vmem:[#allocation27 + $0x20] sm:$0xf]
        %v1962 = vld [vmem:[#allocation27 + $0x24] sm:$0xf]
        %v1963 = vld [vmem:[#allocation27 + $0x28] sm:$0xf]
        %v1964 = vld [vmem:[#allocation27 + $0x2c] sm:$0xf]
        %v1965 = vld [vmem:[#allocation27 + $0x30] sm:$0xf]
        %v1966 = vld [vmem:[#allocation27 + $0x34] sm:$0xf]
        %v1967 = vld [vmem:[#allocation27 + $0x38] sm:$0xf]
        %v1968 = vld [vmem:[#allocation27 + $0x3c] sm:$0xf]
        %v1969 = vld [vmem:[%s23] sm:$0x1]
        %v1971 = vlaneseq
        %v1972 = vshrl.u32 %v1971, 7
        %v1973 = vsub.s32 0, %v1972
        %v1974 = vrot.slane %v1969, %v1973
        %v1992 = vunpack.c.l.b16 %v1953
        %v1993 = vunpack.c.l.b16 %v1954
        %v1994 = vunpack.c.l.b16 %v1955
        %v1995 = vunpack.c.l.b16 %v1956
        %v1996 = vunpack.c.l.b16 %v1957
        %v1997 = vunpack.c.l.b16 %v1958
        %v1998 = vunpack.c.l.b16 %v1959
        %v1999 = vunpack.c.l.b16 %v1960
        %v2000 = vunpack.c.l.b16 %v1961
        %v2001 = vunpack.c.l.b16 %v1962
        %v2002 = vunpack.c.l.b16 %v1963
        %v2003 = vunpack.c.l.b16 %v1964
        %v2004 = vunpack.c.l.b16 %v1965
        %v2005 = vunpack.c.l.b16 %v1966
        %v2006 = vunpack.c.l.b16 %v1967
        %v2007 = vunpack.c.l.b16 %v1968
        %v2008 = vpack.c.b16 %v1993, %v1992
        %v2009 = vpack.c.b16 %v1995, %v1994
        %v2010 = vpack.c.b16 %v1997, %v1996
        %v2011 = vpack.c.b16 %v1999, %v1998
        %v2012 = vpack.c.b16 %v2001, %v2000
        %v2013 = vpack.c.b16 %v2003, %v2002
        %v2014 = vpack.c.b16 %v2005, %v2004
        %v2015 = vpack.c.b16 %v2007, %v2006
        %2024 = vmatprep.subr.bf16.mxu0 0
        %2025 = vmatpush1.bf16.msra.mxu0 %v2008
        %2026 = vmatprep.subr.bf16.mxu0 0
        %2027 = vmatpush1.bf16.msra.mxu0 %v2009
        %2028 = vmatprep.subr.bf16.mxu0 0
        %2029 = vmatpush1.bf16.msra.mxu0 %v2010
        %2030 = vmatprep.subr.bf16.mxu0 0
        %2031 = vmatpush1.bf16.msra.mxu0 %v2011
        %2032 = vmatprep.subr.bf16.mxu0 0
        %2033 = vmatpush1.bf16.msra.mxu0 %v2012
        %2034 = vmatprep.subr.bf16.mxu0 0
        %2035 = vmatpush1.bf16.msra.mxu0 %v2013
        %2036 = vmatprep.subr.bf16.mxu0 0
        %2037 = vmatpush1.bf16.msra.mxu0 %v2014
        %2038 = vmatprep.subr.bf16.mxu0 0
        %2039 = vmatpush1.bf16.msra.mxu0 %v2015
        %2040 = vmatprep.subr.bf16.mxu0 0
        %2041 = vmatpush1.bf16.msra.mxu0 0
        %2042 = vmatprep.subr.bf16.mxu0 0
        %2043 = vmatpush1.bf16.msra.mxu0 0
        %2044 = vmatprep.subr.bf16.mxu0 0
        %2045 = vmatpush1.bf16.msra.mxu0 0
        %2046 = vmatprep.subr.bf16.mxu0 0
        %2047 = vmatpush1.bf16.msra.mxu0 0
        %2048 = vmatprep.subr.bf16.mxu0 0
        %2049 = vmatpush1.bf16.msra.mxu0 0
        %2050 = vmatprep.subr.bf16.mxu0 0
        %2051 = vmatpush1.bf16.msra.mxu0 0
        %2052 = vmatprep.subr.bf16.mxu0 0
        %2053 = vmatpush1.bf16.msra.mxu0 0
        %2054 = vmatprep.subr.bf16.mxu0 0
        %2055 = vmatpush1.bf16.msra.mxu0 0
        %2056 = vmatprep.mubr.bf16.mxu0 0
        %2057 = vmatmul.mubr.bf16.gmra.mrb[0].mxu0 %v1952
        %v2058 = vpop.f32.mrb[0].mxu0
        %v2059 = vadd.f32 %v1974, %v2058
        %v2060 = vpop.f32.mrb[0].mxu0
        %v2061 = vpop.f32.mrb[0].mxu0
        %v2062 = vadd.f32 %v1974, %v2061
        %v2063 = vpop.f32.mrb[0].mxu0
        %2064 = vdwg.mxu0
        %v2065 = vmul.f32 %v2059, %v1589
        %v2066 = vmul.f32 %v2062, %v1592
        %v2067 = vld [vmem:[%s26] sm:$0xff]
        %v2068 = vld [vmem:[%s26 + $0x8] sm:$0xff]
        %v2069 = vld [vmem:[%s26 + $0x10] sm:$0xff]
        %v2070 = vld [vmem:[%s26 + $0x18] sm:$0xff]
        %v2071 = vld [vmem:[%s26 + $0x20] sm:$0xff]
        %v2072 = vld [vmem:[%s26 + $0x28] sm:$0xff]
        %v2073 = vld [vmem:[%s26 + $0x30] sm:$0xff]
        %v2074 = vld [vmem:[%s26 + $0x38] sm:$0xff]
        %v2075 = vld [vmem:[%s26 + $0x40] sm:$0xff]
        %v2076 = vld [vmem:[%s26 + $0x48] sm:$0xff]
        %v2077 = vld [vmem:[%s26 + $0x50] sm:$0xff]
        %v2078 = vld [vmem:[%s26 + $0x58] sm:$0xff]
        %v2079 = vld [vmem:[%s26 + $0x60] sm:$0xff]
        %v2080 = vld [vmem:[%s26 + $0x68] sm:$0xff]
        %v2081 = vld [vmem:[%s26 + $0x70] sm:$0xff]
        %v2082 = vld [vmem:[%s26 + $0x78] sm:$0xff]
        %2083 = vmatprep.subr.mxu0 0.0
        %2084 = vmatpush1.msra.mxu0 %v2067
        %2085 = vmatprep.subr.mxu0 0.0
        %2086 = vmatpush1.msra.mxu0 %v2068
        %2087 = vmatprep.subr.mxu0 0.0
        %2088 = vmatpush1.msra.mxu0 %v2069
        %2089 = vmatprep.subr.mxu0 0.0
        %2090 = vmatpush1.msra.mxu0 %v2070
        %2091 = vmatprep.subr.mxu0 0.0
        %2092 = vmatpush1.msra.mxu0 %v2071
        %2093 = vmatprep.subr.mxu0 0.0
        %2094 = vmatpush1.msra.mxu0 %v2072
        %2095 = vmatprep.subr.mxu0 0.0
        %2096 = vmatpush1.msra.mxu0 %v2073
        %2097 = vmatprep.subr.mxu0 0.0
        %2098 = vmatpush1.msra.mxu0 %v2074
        %2099 = vmatprep.subr.mxu0 0.0
        %2100 = vmatpush1.msra.mxu0 %v2075
        %2101 = vmatprep.subr.mxu0 0.0
        %2102 = vmatpush1.msra.mxu0 %v2076
        %2103 = vmatprep.subr.mxu0 0.0
        %2104 = vmatpush1.msra.mxu0 %v2077
        %2105 = vmatprep.subr.mxu0 0.0
        %2106 = vmatpush1.msra.mxu0 %v2078
        %2107 = vmatprep.subr.mxu0 0.0
        %2108 = vmatpush1.msra.mxu0 %v2079
        %2109 = vmatprep.subr.mxu0 0.0
        %2110 = vmatpush1.msra.mxu0 %v2080
        %2111 = vmatprep.subr.mxu0 0.0
        %2112 = vmatpush1.msra.mxu0 %v2081
        %2113 = vmatprep.subr.mxu0 0.0
        %2114 = vmatpush1.msra.mxu0 %v2082
        %2115 = vmatprep.subr.mxu0 0.0
        %2116 = vmatpush1.msra.mxu0 0.0
        %2117 = vmatprep.subr.mxu0 0.0
        %2118 = vmatpush1.msra.mxu0 0.0
        %2119 = vmatprep.subr.mxu0 0.0
        %2120 = vmatpush1.msra.mxu0 0.0
        %2121 = vmatprep.subr.mxu0 0.0
        %2122 = vmatpush1.msra.mxu0 0.0
        %2123 = vmatprep.subr.mxu0 0.0
        %2124 = vmatpush1.msra.mxu0 0.0
        %2125 = vmatprep.subr.mxu0 0.0
        %2126 = vmatpush1.msra.mxu0 0.0
        %2127 = vmatprep.subr.mxu0 0.0
        %2128 = vmatpush1.msra.mxu0 0.0
        %2129 = vmatprep.subr.mxu0 0.0
        %2130 = vmatpush1.msra.mxu0 0.0
        %2131 = vmatprep.subr.mxu0 0.0
        %2132 = vmatpush1.msra.mxu0 0.0
        %2133 = vmatprep.subr.mxu0 0.0
        %2134 = vmatpush1.msra.mxu0 0.0
        %2135 = vmatprep.subr.mxu0 0.0
        %2136 = vmatpush1.msra.mxu0 0.0
        %2137 = vmatprep.subr.mxu0 0.0
        %2138 = vmatpush1.msra.mxu0 0.0
        %2139 = vmatprep.subr.mxu0 0.0
        %2140 = vmatpush1.msra.mxu0 0.0
        %2141 = vmatprep.subr.mxu0 0.0
        %2142 = vmatpush1.msra.mxu0 0.0
        %2143 = vmatprep.subr.mxu0 0.0
        %2144 = vmatpush1.msra.mxu0 0.0
        %2145 = vmatprep.subr.mxu0 0.0
        %2146 = vmatpush1.msra.mxu0 0.0
        %2147 = vmatprep.mubr.f32.mxu0 0.0
        %2148 = vmatmul.mubr.f32.gmra.mrb[0].mxu0 %v2065
        %v2149 = vpop.f32.mrb[0].mxu0
        %v2150 = vadd.f32 0.0, %v2149
        %v2151 = vpop.f32.mrb[0].mxu0
        %2152 = vmatprep.mubr.f32.mxu0 0.0
        %2153 = vmatmul.mubr.f32.gmra.mrb[0].mxu0 %v2066
        %v2154 = vpop.f32.mrb[0].mxu0
        %v2155 = vadd.f32 0.0, %v2154
        %v2156 = vpop.f32.mrb[0].mxu0
        %2157 = vdwg.mxu0
        %v2158 = vlaneseq
        %v2159 = vshrl.u32 %v2158, 7
        %v2160 = vadd.s32 %v2159, 8
        %v2161 = vstv %s974
        %v2162 = vadd.s32 %v2161, %v2159
        %v2163 = vadd.s32 %v2161, %v2160
        %vm2164 = vcmp.lt.s32.totalorder %v2162, 50
        %vm2165 = vcmp.lt.s32.totalorder %v2163, 50
        %v2166 = vsel %vm2164, 1, 0
        %v2167 = vsel %vm2165, 1, 0
        %v2168 = vcvt.s32.f32 %v2166
        %v2169 = vcvt.s32.f32 %v2167
        %v2170 = vmul.f32 %v2150, 1.442695
        %v2171 = vpow.pop %v2170
        %v2172 = vmul.f32 %v2155, 1.442695
        %v2173 = vpow.pop %v2172
        %v2174 = vmul.f32 %v2171, %v2168
        %v2175 = vmul.f32 %v2173, %v2169
        %v2176 = vld [vmem:[%s27] sm:$0xff]
        %v2177 = vld [vmem:[%s27 + $0x8] sm:$0xff]
        %v2179 = vsel %vm1027, %v2174, 0
        %v2182 = vsel %vm1027, %v2175, 0
        %2184 = vmatprep.subr.mxu0 0.0
        %2185 = vmatpush1.msra.mxu0 %v2176
        %2186 = vmatprep.subr.mxu0 0.0
        %2187 = vmatpush1.msra.mxu0 %v2177
        %2188 = vmatprep.subr.mxu0 0.0
        %2189 = vmatpush1.msra.mxu0 0.0
        %2190 = vmatprep.subr.mxu0 0.0
        %2191 = vmatpush1.msra.mxu0 0.0
        %2192 = vmatprep.subr.mxu0 0.0
        %2193 = vmatpush1.msra.mxu0 0.0
        %2194 = vmatprep.subr.mxu0 0.0
        %2195 = vmatpush1.msra.mxu0 0.0
        %2196 = vmatprep.subr.mxu0 0.0
        %2197 = vmatpush1.msra.mxu0 0.0
        %2198 = vmatprep.subr.mxu0 0.0
        %2199 = vmatpush1.msra.mxu0 0.0
        %2200 = vmatprep.subr.mxu0 0.0
        %2201 = vmatpush1.msra.mxu0 0.0
        %2202 = vmatprep.subr.mxu0 0.0
        %2203 = vmatpush1.msra.mxu0 0.0
        %2204 = vmatprep.subr.mxu0 0.0
        %2205 = vmatpush1.msra.mxu0 0.0
        %2206 = vmatprep.subr.mxu0 0.0
        %2207 = vmatpush1.msra.mxu0 0.0
        %2208 = vmatprep.subr.mxu0 0.0
        %2209 = vmatpush1.msra.mxu0 0.0
        %2210 = vmatprep.subr.mxu0 0.0
        %2211 = vmatpush1.msra.mxu0 0.0
        %2212 = vmatprep.subr.mxu0 0.0
        %2213 = vmatpush1.msra.mxu0 0.0
        %2214 = vmatprep.subr.mxu0 0.0
        %2215 = vmatpush1.msra.mxu0 0.0
        %2216 = vmatprep.subr.mxu0 0.0
        %2217 = vmatpush1.msra.mxu0 0.0
        %2218 = vmatprep.subr.mxu0 0.0
        %2219 = vmatpush1.msra.mxu0 0.0
        %2220 = vmatprep.subr.mxu0 0.0
        %2221 = vmatpush1.msra.mxu0 0.0
        %2222 = vmatprep.subr.mxu0 0.0
        %2223 = vmatpush1.msra.mxu0 0.0
        %2224 = vmatprep.subr.mxu0 0.0
        %2225 = vmatpush1.msra.mxu0 0.0
        %2226 = vmatprep.subr.mxu0 0.0
        %2227 = vmatpush1.msra.mxu0 0.0
        %2228 = vmatprep.subr.mxu0 0.0
        %2229 = vmatpush1.msra.mxu0 0.0
        %2230 = vmatprep.subr.mxu0 0.0
        %2231 = vmatpush1.msra.mxu0 0.0
        %2232 = vmatprep.subr.mxu0 0.0
        %2233 = vmatpush1.msra.mxu0 0.0
        %2234 = vmatprep.subr.mxu0 0.0
        %2235 = vmatpush1.msra.mxu0 0.0
        %2236 = vmatprep.subr.mxu0 0.0
        %2237 = vmatpush1.msra.mxu0 0.0
        %2238 = vmatprep.subr.mxu0 0.0
        %2239 = vmatpush1.msra.mxu0 0.0
        %2240 = vmatprep.subr.mxu0 0.0
        %2241 = vmatpush1.msra.mxu0 0.0
        %2242 = vmatprep.subr.mxu0 0.0
        %2243 = vmatpush1.msra.mxu0 0.0
        %2244 = vmatprep.subr.mxu0 0.0
        %2245 = vmatpush1.msra.mxu0 0.0
        %2246 = vmatprep.subr.mxu0 0.0
        %2247 = vmatpush1.msra.mxu0 0.0
        %2248 = vmatprep.mubr.f32.mxu0 0.0
        %2249 = vmatmul.mubr.f32.gmra.mrb[0].mxu0 %v2179
        %v2250 = vpop.f32.mrb[0].mxu0
        %v2251 = vadd.f32 0.0, %v2250
        %v2252 = vpop.f32.mrb[0].mxu0
        %2253 = vmatprep.mubr.f32.mxu0 0.0
        %2254 = vmatmul.mubr.f32.gmra.mrb[0].mxu0 %v2182
        %v2255 = vpop.f32.mrb[0].mxu0
        %v2256 = vadd.f32 0.0, %v2255
        %v2257 = vpop.f32.mrb[0].mxu0
        %2258 = vdwg.mxu0
        %v2259 = vmul.f32 %v2251, %v1796
        %v2260 = vmul.f32 %v2256, %v1797
        %2261 = vst [vmem:[#allocation4] sm:$0xff] %v2259
        %2262 = vst [vmem:[#allocation4 + $0x10] sm:$0xff] %v2260
        %2263 = vst [vmem:[#allocation4 + $0x8] sm:$0xff] %v2251
        %2264 = vst [vmem:[#allocation4 + $0x18] sm:$0xff] %v2256
        loop: start=0, step=1, limit=16
        $region184: #{tpu_custom_call.1} parent=123 // loop_pre_header
          _
        $region185: #{tpu_custom_call.1} parent=123 // loop_header
          %s2266 = sphi 0, %s2270
          %p2267 = scmp.ge.s32.totalorder %s2266, 16
        $region186: #{tpu_custom_call.1} parent=123 // loop_header_branch
          %2269 = sbr.rel (%p2267) target = $region190
        $region187: #{tpu_custom_call.1} parent=123 // loop_body
          %s2271 = sadd.s32 %s974, %s2266
          %s2272 = sld [smem:[#allocation7 + %s2271]]
          %s2273 = sshra.s32 %s2272, 3
          %s2274 = sand.u32 %s2272, 7
          %s2275 = sshra.s32 %s2272, 3
          %s2276 = sand.u32 %s2272, 7
          %s2277 = smul.u32 %s2273, 2
          %s2278 = smul.u32 %s2277, 8
          %s2279 = sadd.s32 %s2278, %s2276
          %s2280 = scalar_lea.vmem [#allocation29], %s2279
          %v2281 = vld [vmem:[%s2280] ss:$8 sm:$0x3]
          %s2282 = sshra.s32 %s2266, 3
          %s2283 = sand.u32 %s2266, 7
          %s2284 = sshra.s32 %s2266, 3
          %s2285 = sand.u32 %s2266, 7
          %s2286 = smul.u32 %s2282, 2
          %s2287 = smul.u32 %s2286, 8
          %s2288 = sadd.s32 %s2287, %s2285
          %s2289 = scalar_lea.vmem [#allocation4], %s2288
          %v2290 = vld [vmem:[%s2289] ss:$8 sm:$0x3]
          %v2291 = vadd.f32 %v2281, %v2290
          %v2292 = vlaneseq
          %vm2293 = vcmp.ge.s32.totalorder %v2292, 0
          %vm2294 = vcmp.lt.s32.totalorder %v2292, 256
          %vm2295 = vmand %vm2293, %vm2294
          %2296 = vst.msk [vmem:[%s2280] ss:$8 sm:$0x3] %vm2295, %v2291
          %2297 = vst.msk [vmem:[%s2280] ss:$8 sm:$0x0] %vm2295, %v2291
        $region188: #{tpu_custom_call.1} parent=123 // loop_footer
          %s2270 = sadd.s32 1, %s2266
        $region189: #{tpu_custom_call.1} parent=123 // loop_footer_branch
          %2265 = sbr.rel target = $region185
        $region190: #{tpu_custom_call.1} parent=123 // loop_exit
          _
        // Predicated region
        $region191: #{tpu_custom_call.1} parent=123 // pred_check
          %p2298 = pneg %p624
        $region192: #{tpu_custom_call.1} parent=123 // pred_check_branch
          %2300 = sbr.rel (%p2298) target = $region194
        $region193: #{tpu_custom_call.1} parent=123 // pred_region
          %s2302 = ssub.s32 768, 768
          %2303 = vsyncadd [#allocation11], %s2302
          %s2304 = sshll.u32 [#allocation29], 4
          %s2305 = int_to_ptr.vmem [resolvable:$true] %s2304
          %2310 = dma.vmem_to_hbm [thread:$0]  %s2305, 768, %s28, [#allocation11], 256, 256, 16
        $region194: #{tpu_custom_call.1} parent=123 // pred_fallthru
          _
        // Predicated region
        $region195: #{tpu_custom_call.1} parent=123 // pred_check
          %p2311 = pneg %p624
        $region196: #{tpu_custom_call.1} parent=123 // pred_check_branch
          %2313 = sbr.rel (%p2311) target = $region198
        $region197: #{tpu_custom_call.1} parent=123 // pred_region
          %2314 = dma.done [#allocation11], 768
        $region198: #{tpu_custom_call.1} parent=123 // pred_fallthru
          _
      $region124: #{tpu_custom_call.1} parent=5 // pred_fallthru
        _
      %p2315 = scmp.le.s32.totalorder 2, %s50
      // Predicated region
      $region199: #{tpu_custom_call.1} parent=5 // pred_check
        %p2316 = pneg %p2315
      $region200: #{tpu_custom_call.1} parent=5 // pred_check_branch
        %2318 = sbr.rel (%p2316) target = $region202
      $region201: #{tpu_custom_call.1} parent=5 // pred_region
        %s2319 = ssub.s32 %s50, 2
      $region202: #{tpu_custom_call.1} parent=5 // pred_fallthru
        _
    $region6: #{tpu_custom_call.1} parent=1 // loop_footer
      %s54 = sadd.s32 1, %s50
    $region7: #{tpu_custom_call.1} parent=1 // loop_footer_branch
      %49 = sbr.rel target = $region3
    $region8: #{tpu_custom_call.1} parent=1 // loop_exit
      _
    %2320 = vsyncpa [#allocation10], 1
    %s2321 = scalar_lea.sflag [#allocation10], 1
    %2322 = vsyncpa %s2321, 1
    %2323 = vsyncpa [#allocation13], 1
    %2324 = vsyncpa [#allocation16], 1
    %2325 = vsyncpa [#allocation19], 1
    %2326 = vsyncpa [#allocation22], 1
    %2327 = vsyncpa [#allocation25], 1
    %2328 = vsyncpa [#allocation28], 1
    %2329 = vsyncpa [#allocation11], 1
    %s2330 = scalar_lea.sflag [#allocation11], 1
    %2331 = vsyncpa %s2330, 1

</llo_original>
